<compile_context>
chip_gen: v6e
topology: v6e:2x2x1
jax: 0.10.0
libtpu: 0.0.40
codegen_flags: <defaults>
</compile_context>

<pallas_src>
import math

import jax
import jax.numpy as jnp
from jax.experimental import pallas as pl
from jax.experimental.pallas import tpu as pltpu


def decoder_block_kernel(x_ref, mask_ref,
                         wq_ref, wk_ref, wv_ref, wo_ref,
                         ln1_g_ref, ln1_b_ref,
                         w1_ref, b1_ref, w2_ref, b2_ref,
                         ln2_g_ref, ln2_b_ref,
                         out_ref, attn_ref,
                         acc_ref,
                         *, eps=1e-5):
    h_id = pl.program_id(1)
    n_heads = pl.num_programs(1)
    b_blk, S, H = x_ref.shape
    d_k = wq_ref.shape[-1]
    d_v = wv_ref.shape[-1]

    @pl.when(h_id == 0)
    def _init():
        acc_ref[...] = jnp.zeros_like(acc_ref)

    x = x_ref[...]                                   # (Bblk, S, H) f32
    x2d = x.reshape(b_blk * S, H)                    # layout-preserving collapse
    x_bf = x2d.astype(jnp.bfloat16)

    # Per-head projections; weights already stored (H, d) -> no in-kernel .T
    q = jnp.dot(x_bf, wq_ref[...], preferred_element_type=jnp.float32)   # (Bblk*S, d_k)
    k = jnp.dot(x_bf, wk_ref[...], preferred_element_type=jnp.float32)
    v = jnp.dot(x_bf, wv_ref[...], preferred_element_type=jnp.float32)
    q3 = q.reshape(b_blk, S, d_k).astype(jnp.bfloat16)
    k3 = k.reshape(b_blk, S, d_k).astype(jnp.bfloat16)
    v3 = v.reshape(b_blk, S, d_v).astype(jnp.bfloat16)

    scale = 1.0 / math.sqrt(d_k)
    s = jnp.einsum('bqd,bkd->bqk', q3, k3,
                   preferred_element_type=jnp.float32) * scale           # (Bblk, S, S)
    s = jnp.where(mask_ref[...] > 0.5, -1e9, s)
    s = s - jnp.max(s, axis=-1, keepdims=True)
    p = jnp.exp(s)
    w = p * pl.reciprocal(jnp.sum(p, axis=-1, keepdims=True), approx=True)
    attn_ref[...] = w.reshape(b_blk, 1, S, S)

    ctx = jnp.einsum('bqk,bkd->bqd', w.astype(jnp.bfloat16), v3,
                     preferred_element_type=jnp.float32)                 # (Bblk, S, d_v)
    ctx2 = ctx.reshape(b_blk * S, d_v).astype(jnp.bfloat16)
    # Accumulate this head's slice of the output projection (lane-dense store).
    acc_ref[...] += jnp.dot(ctx2, wo_ref[...], preferred_element_type=jnp.float32)

    @pl.when(h_id == n_heads - 1)
    def _finalize():
        def layernorm(t, g, b):
            m = jnp.mean(t, axis=-1, keepdims=True)
            var = jnp.mean((t - m) ** 2, axis=-1, keepdims=True)
            return (t - m) * jax.lax.rsqrt(var + eps) * g + b

        # attention output projection + residual + LayerNorm
        y = layernorm(acc_ref[...] + x2d, ln1_g_ref[...], ln1_b_ref[...])

        # Position-wise FFN + residual + LayerNorm
        h1 = jnp.maximum(
            jnp.dot(y.astype(jnp.bfloat16), w1_ref[...],
                    preferred_element_type=jnp.float32) + b1_ref[...], 0.0)
        h2 = jnp.dot(h1.astype(jnp.bfloat16), w2_ref[...],
                     preferred_element_type=jnp.float32) + b2_ref[...]
        z = layernorm(h2 + y, ln2_g_ref[...], ln2_b_ref[...])
        out_ref[...] = z.reshape(b_blk, S, H)


def decoder_block(x, mask_f32, params, *, num_heads, d_k, d_v, b_block=None):
    B, S, H = x.shape

    if b_block is None:
        if S % 8 == 0:
            # keep in-kernel leading-dim reshapes tile-aligned (f32 sublane = 8)
            b_block = max(1, min(B, 512 // max(S, 1)))
            while B % b_block:
                b_block -= 1
        else:
            b_block = 1
    assert B % b_block == 0

    # Host-side weight prep: head-split and pre-transposed, bf16 for the MXU.
    wdt = jnp.bfloat16
    wq3 = params["wq"].reshape(num_heads, d_k, H).transpose(0, 2, 1).astype(wdt)  # (nh, H, dk)
    wk3 = params["wk"].reshape(num_heads, d_k, H).transpose(0, 2, 1).astype(wdt)  # (nh, H, dk)
    wv3 = params["wv"].reshape(num_heads, d_v, H).transpose(0, 2, 1).astype(wdt)  # (nh, H, dv)
    wo3 = params["wo"].T.reshape(num_heads, d_v, H).astype(wdt)                   # (nh, dv, H)
    w1_t = params["w1"].T.astype(wdt)                                             # (H, ffn)
    w2_t = params["w2"].T.astype(wdt)                                             # (ffn, H)

    def const_spec(shape):
        n = len(shape)
        return pl.BlockSpec(shape, lambda b, h, n=n: (0,) * n)

    grid_spec = pltpu.PrefetchScalarGridSpec(
        num_scalar_prefetch=0,
        grid=(B // b_block, num_heads),
        in_specs=[
            pl.BlockSpec((b_block, S, H), lambda b, h: (b, 0, 0)),    # X (resident across heads)
            pl.BlockSpec((b_block, S, S), lambda b, h: (b, 0, 0)),    # mask (resident across heads)
            pl.BlockSpec((None, H, d_k), lambda b, h: (h, 0, 0)),     # Wq, per head
            pl.BlockSpec((None, H, d_k), lambda b, h: (h, 0, 0)),     # Wk, per head
            pl.BlockSpec((None, H, d_v), lambda b, h: (h, 0, 0)),     # Wv, per head
            pl.BlockSpec((None, d_v, H), lambda b, h: (h, 0, 0)),     # Wo, per head
            const_spec(params["ln1_g"].shape),
            const_spec(params["ln1_b"].shape),
            const_spec(w1_t.shape),
            const_spec(params["b1"].shape),
            const_spec(w2_t.shape),
            const_spec(params["b2"].shape),
            const_spec(params["ln2_g"].shape),
            const_spec(params["ln2_b"].shape),
        ],
        out_specs=[
            pl.BlockSpec((b_block, S, H), lambda b, h: (b, 0, 0)),
            pl.BlockSpec((b_block, 1, S, S), lambda b, h: (b, h, 0, 0)),
        ],
        scratch_shapes=[pltpu.VMEM((b_block * S, H), jnp.float32)],
    )
    out_shapes = (
        jax.ShapeDtypeStruct((B, S, H), jnp.float32),
        jax.ShapeDtypeStruct((B, num_heads, S, S), jnp.float32),
    )
    return pl.pallas_call(
        decoder_block_kernel,
        out_shape=out_shapes,
        grid_spec=grid_spec,
        compiler_params=pltpu.CompilerParams(
            dimension_semantics=("parallel", "arbitrary")),
    )(x, mask_f32,
      wq3, wk3, wv3, wo3,
      params["ln1_g"], params["ln1_b"],
      w1_t, params["b1"], w2_t, params["b2"],
      params["ln2_g"], params["ln2_b"])


def reference_decoder_block(x, mask_bool, params, *, num_heads, d_k, d_v, eps=1e-5):
    """Pure-JAX f32 reference matching the PyTorch forward exactly."""
    B, S, H = x.shape

    def layernorm(t, g, b):
        m = jnp.mean(t, axis=-1, keepdims=True)
        v = jnp.mean((t - m) ** 2, axis=-1, keepdims=True)
        return (t - m) * jax.lax.rsqrt(v + eps) * g + b

    q = (x @ params["wq"].T).reshape(B, S, num_heads, d_k).transpose(0, 2, 1, 3)
    k = (x @ params["wk"].T).reshape(B, S, num_heads, d_k).transpose(0, 2, 1, 3)
    v = (x @ params["wv"].T).reshape(B, S, num_heads, d_v).transpose(0, 2, 1, 3)
    scores = jnp.einsum("bhqd,bhkd->bhqk", q, k) / math.sqrt(d_k)
    scores = jnp.where(mask_bool[:, None, :, :], -1e9, scores)
    weights = jax.nn.softmax(scores, axis=-1)
    out = jnp.einsum("bhqk,bhkd->bhqd", weights, v)
    out = out.transpose(0, 2, 1, 3).reshape(B, S, num_heads * d_v)
    out = out @ params["wo"].T
    out = layernorm(out + x, params["ln1_g"][0], params["ln1_b"][0])
    h1 = jax.nn.relu(out @ params["w1"].T + params["b1"][0])
    h2 = h1 @ params["w2"].T + params["b2"][0]
    out2 = layernorm(h2 + out, params["ln2_g"][0], params["ln2_b"][0])
    return out2, weights


if __name__ == "__main__":
    # Small config consistent with DecoderBlock(key_size, value_size, num_hiddens,
    # num_heads, ffn_hiddens)
    B, S = 2, 8
    num_hiddens = 32
    num_heads = 4
    key_size = 8
    value_size = 8
    ffn_hiddens = 64

    key = jax.random.PRNGKey(0)
    ks = jax.random.split(key, 10)

    params = {
        "wq": jax.random.normal(ks[0], (key_size * num_heads, num_hiddens), jnp.float32) * 0.05,
        "wk": jax.random.normal(ks[1], (key_size * num_heads, num_hiddens), jnp.float32) * 0.05,
        "wv": jax.random.normal(ks[2], (value_size * num_heads, num_hiddens), jnp.float32) * 0.05,
        "wo": jax.random.normal(ks[3], (num_hiddens, value_size * num_heads), jnp.float32) * 0.05,
        "ln1_g": jnp.ones((1, num_hiddens), jnp.float32),
        "ln1_b": jnp.zeros((1, num_hiddens), jnp.float32),
        "w1": jax.random.normal(ks[4], (ffn_hiddens, num_hiddens), jnp.float32) * 0.05,
        "b1": jax.random.normal(ks[5], (1, ffn_hiddens), jnp.float32) * 0.05,
        "w2": jax.random.normal(ks[6], (num_hiddens, ffn_hiddens), jnp.float32) * 0.05,
        "b2": jax.random.normal(ks[7], (1, num_hiddens), jnp.float32) * 0.05,
        "ln2_g": jnp.ones((1, num_hiddens), jnp.float32),
        "ln2_b": jnp.zeros((1, num_hiddens), jnp.float32),
    }

    x = jax.random.normal(ks[8], (B, S, num_hiddens), jnp.float32)
    # Causal decoder mask: True (masked) above the diagonal.
    causal = jnp.triu(jnp.ones((S, S), dtype=bool), k=1)
    mask_bool = jnp.broadcast_to(causal, (B, S, S))
    mask_f32 = mask_bool.astype(jnp.float32)

    out, attn_w = decoder_block(x, mask_f32, params,
                                num_heads=num_heads, d_k=key_size, d_v=value_size)
    out = jax.block_until_ready(out)
    attn_w = jax.block_until_ready(attn_w)

    ref_out, ref_w = reference_decoder_block(x, mask_bool, params,
                                             num_heads=num_heads,
                                             d_k=key_size, d_v=value_size)
    assert out.shape == (B, S, num_hiddens)
    assert attn_w.shape == (B, num_heads, S, S)
    # bf16 MXU operands + approx softmax reciprocal -> relaxed (but tight) tolerances
    assert jnp.allclose(out, ref_out, atol=3e-2, rtol=3e-2)
    assert jnp.allclose(attn_w, ref_w, atol=5e-3, rtol=1e-2)

    print("KERNEL_OK")
</pallas_src>

<mosaic_0001>
module attributes {stable_mosaic.version = 11 : i64} {
  func.func @decoder_block_kernel(%arg0: i32, %arg1: i32, %arg2: memref<2x8x32xf32, #tpu.memory_space<vmem>>, %arg3: memref<2x8x8xf32, #tpu.memory_space<vmem>>, %arg4: memref<1x32x8xbf16, #tpu.memory_space<vmem>>, %arg5: memref<1x32x8xbf16, #tpu.memory_space<vmem>>, %arg6: memref<1x32x8xbf16, #tpu.memory_space<vmem>>, %arg7: memref<1x8x32xbf16, #tpu.memory_space<vmem>>, %arg8: memref<1x32xf32, #tpu.memory_space<vmem>>, %arg9: memref<1x32xf32, #tpu.memory_space<vmem>>, %arg10: memref<32x64xbf16, #tpu.memory_space<vmem>>, %arg11: memref<1x64xf32, #tpu.memory_space<vmem>>, %arg12: memref<64x32xbf16, #tpu.memory_space<vmem>>, %arg13: memref<1x32xf32, #tpu.memory_space<vmem>>, %arg14: memref<1x32xf32, #tpu.memory_space<vmem>>, %arg15: memref<1x32xf32, #tpu.memory_space<vmem>>, %arg16: memref<2x8x32xf32, #tpu.memory_space<vmem>>, %arg17: memref<2x1x8x8xf32, #tpu.memory_space<vmem>>, %arg18: memref<16x32xf32, #tpu.memory_space<vmem>>) attributes {dimension_semantics = [#tpu.dimension_semantics<parallel>, #tpu.dimension_semantics<arbitrary>], iteration_bounds = array<i64: 1, 4>, scalar_prefetch = 0 : i64, scratch_operands = 1 : i64, tpu.core_type = #tpu.core_type<tc>, window_params = [{transform_indices = @transform_0, window_bounds = array<i64: 2, 8, 32>}, {transform_indices = @transform_1, window_bounds = array<i64: 2, 8, 8>}, {transform_indices = @transform_2, window_bounds = array<i64: 1, 32, 8>}, {transform_indices = @transform_3, window_bounds = array<i64: 1, 32, 8>}, {transform_indices = @transform_4, window_bounds = array<i64: 1, 32, 8>}, {transform_indices = @transform_5, window_bounds = array<i64: 1, 8, 32>}, {pipeline_mode = #tpu.pipeline_mode<synchronous>, transform_indices = @transform_6, window_bounds = array<i64: 1, 32>}, {pipeline_mode = #tpu.pipeline_mode<synchronous>, transform_indices = @transform_7, window_bounds = array<i64: 1, 32>}, {pipeline_mode = #tpu.pipeline_mode<synchronous>, transform_indices = @transform_8, window_bounds = array<i64: 32, 64>}, {pipeline_mode = #tpu.pipeline_mode<synchronous>, transform_indices = @transform_9, window_bounds = array<i64: 1, 64>}, {pipeline_mode = #tpu.pipeline_mode<synchronous>, transform_indices = @transform_10, window_bounds = array<i64: 64, 32>}, {pipeline_mode = #tpu.pipeline_mode<synchronous>, transform_indices = @transform_11, window_bounds = array<i64: 1, 32>}, {pipeline_mode = #tpu.pipeline_mode<synchronous>, transform_indices = @transform_12, window_bounds = array<i64: 1, 32>}, {pipeline_mode = #tpu.pipeline_mode<synchronous>, transform_indices = @transform_13, window_bounds = array<i64: 1, 32>}, {transform_indices = @transform_14, window_bounds = array<i64: 2, 8, 32>}, {transform_indices = @transform_15, window_bounds = array<i64: 2, 1, 8, 8>}]} {
    %c0_i32 = arith.constant 0 : i32
    %0 = arith.cmpi eq, %arg1, %c0_i32 : i32
    %1 = arith.extui %0 : i1 to i32
    %c0_i32_0 = arith.constant 0 : i32
    %2 = arith.cmpi ne, %1, %c0_i32_0 : i32
    scf.if %2 {
      %cst_37 = arith.constant 0.000000e+00 : f32
      %54 = vector.broadcast %cst_37 : f32 to vector<16x32xf32>
      %c0_38 = arith.constant 0 : index
      %c0_39 = arith.constant 0 : index
      %55 = vector.load %arg18[%c0_38, %c0_39] : memref<16x32xf32, #tpu.memory_space<vmem>>, vector<16x32xf32>
      tpu.vector_store %arg18[%c0_38, %c0_39], %54 {strides = array<i32>} : memref<16x32xf32, #tpu.memory_space<vmem>>, vector<16x32xf32>,
    } else {
    }
    %c0 = arith.constant 0 : index
    %c0_1 = arith.constant 0 : index
    %c0_2 = arith.constant 0 : index
    %3 = vector.load %arg2[%c0, %c0_1, %c0_2] : memref<2x8x32xf32, #tpu.memory_space<vmem>>, vector<2x8x32xf32>
    %4 = vector.shape_cast %3 : vector<2x8x32xf32> to vector<16x32xf32>
    %5 = arith.truncf %4 : vector<16x32xf32> to vector<16x32xbf16>
    %c0_3 = arith.constant 0 : index
    %c0_4 = arith.constant 0 : index
    %c0_5 = arith.constant 0 : index
    %6 = vector.load %arg4[%c0_3, %c0_4, %c0_5] : memref<1x32x8xbf16, #tpu.memory_space<vmem>>, vector<1x32x8xbf16>
    %7 = vector.shape_cast %6 : vector<1x32x8xbf16> to vector<32x8xbf16>
    %cst = arith.constant dense<0.000000e+00> : vector<16x8xf32>
    %8 = tpu.matmul %5, %7, %cst {dimension_numbers = #tpu.dot_dimension_numbers<[1], [0], [0], [1], [0, 0, 1, 1], [], []>} : vector<16x32xbf16>, vector<32x8xbf16>, vector<16x8xf32> -> vector<16x8xf32>
    %c0_6 = arith.constant 0 : index
    %c0_7 = arith.constant 0 : index
    %c0_8 = arith.constant 0 : index
    %9 = vector.load %arg5[%c0_6, %c0_7, %c0_8] : memref<1x32x8xbf16, #tpu.memory_space<vmem>>, vector<1x32x8xbf16>
    %10 = vector.shape_cast %9 : vector<1x32x8xbf16> to vector<32x8xbf16>
    %cst_9 = arith.constant dense<0.000000e+00> : vector<16x8xf32>
    %11 = tpu.matmul %5, %10, %cst_9 {dimension_numbers = #tpu.dot_dimension_numbers<[1], [0], [0], [1], [0, 0, 1, 1], [], []>} : vector<16x32xbf16>, vector<32x8xbf16>, vector<16x8xf32> -> vector<16x8xf32>
    %c0_10 = arith.constant 0 : index
    %c0_11 = arith.constant 0 : index
    %c0_12 = arith.constant 0 : index
    %12 = vector.load %arg6[%c0_10, %c0_11, %c0_12] : memref<1x32x8xbf16, #tpu.memory_space<vmem>>, vector<1x32x8xbf16>
    %13 = vector.shape_cast %12 : vector<1x32x8xbf16> to vector<32x8xbf16>
    %cst_13 = arith.constant dense<0.000000e+00> : vector<16x8xf32>
    %14 = tpu.matmul %5, %13, %cst_13 {dimension_numbers = #tpu.dot_dimension_numbers<[1], [0], [0], [1], [0, 0, 1, 1], [], []>} : vector<16x32xbf16>, vector<32x8xbf16>, vector<16x8xf32> -> vector<16x8xf32>
    %15 = vector.shape_cast %8 : vector<16x8xf32> to vector<2x8x8xf32>
    %16 = arith.truncf %15 : vector<2x8x8xf32> to vector<2x8x8xbf16>
    %17 = vector.shape_cast %11 : vector<16x8xf32> to vector<2x8x8xf32>
    %18 = arith.truncf %17 : vector<2x8x8xf32> to vector<2x8x8xbf16>
    %19 = vector.shape_cast %14 : vector<16x8xf32> to vector<2x8x8xf32>
    %20 = arith.truncf %19 : vector<2x8x8xf32> to vector<2x8x8xbf16>
    "tpu.trace_start"() <{level = 10 : i32, message = "bqd,bkd->bqk"}> : () -> ()
    %cst_14 = arith.constant dense<0.000000e+00> : vector<2x8x8xf32>
    %21 = tpu.matmul %16, %18, %cst_14 {dimension_numbers = #tpu.dot_dimension_numbers<[2], [2], [1], [1], [0, 0, 0, 1, 1, 1], [0], [0]>} : vector<2x8x8xbf16>, vector<2x8x8xbf16>, vector<2x8x8xf32> -> vector<2x8x8xf32>
    "tpu.trace_stop"() : () -> ()
    %cst_15 = arith.constant 0.353553385 : f32
    %22 = vector.broadcast %cst_15 : f32 to vector<2x8x8xf32>
    %23 = arith.mulf %21, %22 : vector<2x8x8xf32>
    %c0_16 = arith.constant 0 : index
    %c0_17 = arith.constant 0 : index
    %c0_18 = arith.constant 0 : index
    %24 = vector.load %arg3[%c0_16, %c0_17, %c0_18] : memref<2x8x8xf32, #tpu.memory_space<vmem>>, vector<2x8x8xf32>
    %cst_19 = arith.constant 5.000000e-01 : f32
    %25 = vector.broadcast %cst_19 : f32 to vector<2x8x8xf32>
    %26 = arith.cmpf ogt, %24, %25 : vector<2x8x8xf32>
    %cst_20 = arith.constant -1.000000e+09 : f32
    %27 = vector.broadcast %cst_20 : f32 to vector<2x8x8xf32>
    %28 = arith.select %26, %27, %23 : vector<2x8x8xi1>, vector<2x8x8xf32>
    %cst_21 = arith.constant dense<0xFF800000> : vector<2x8xf32>
    %29 = vector.multi_reduction <maximumf>, %28, %cst_21 [2] : vector<2x8x8xf32> to vector<2x8xf32>
    %30 = vector.shape_cast %29 : vector<2x8xf32> to vector<2x8x1xf32>
    %31 = vector.broadcast %30 : vector<2x8x1xf32> to vector<2x8x8xf32>
    %32 = arith.subf %28, %31 : vector<2x8x8xf32>
    %33 = math.exp %32 : vector<2x8x8xf32>
    %cst_22 = arith.constant dense<0.000000e+00> : vector<2x8xf32>
    %34 = vector.multi_reduction <add>, %33, %cst_22 [2] : vector<2x8x8xf32> to vector<2x8xf32>
    %35 = vector.shape_cast %34 : vector<2x8xf32> to vector<2x8x1xf32>
    %36 = tpu.reciprocal %35 {approx = true} : vector<2x8x1xf32> -> vector<2x8x1xf32>
    %37 = vector.broadcast %36 : vector<2x8x1xf32> to vector<2x8x8xf32>
    %38 = arith.mulf %33, %37 : vector<2x8x8xf32>
    %39 = vector.shape_cast %38 : vector<2x8x8xf32> to vector<2x1x8x8xf32>
    %c0_23 = arith.constant 0 : index
    %c0_24 = arith.constant 0 : index
    %c0_25 = arith.constant 0 : index
    %c0_26 = arith.constant 0 : index
    %40 = vector.load %arg17[%c0_23, %c0_24, %c0_25, %c0_26] : memref<2x1x8x8xf32, #tpu.memory_space<vmem>>, vector<2x1x8x8xf32>
    tpu.vector_store %arg17[%c0_23, %c0_24, %c0_25, %c0_26], %39 {strides = array<i32>} : memref<2x1x8x8xf32, #tpu.memory_space<vmem>>, vector<2x1x8x8xf32>,
    %41 = arith.truncf %38 : vector<2x8x8xf32> to vector<2x8x8xbf16>
    "tpu.trace_start"() <{level = 10 : i32, message = "bqk,bkd->bqd"}> : () -> ()
    %cst_27 = arith.constant dense<0.000000e+00> : vector<2x8x8xf32>
    %42 = tpu.matmul %41, %20, %cst_27 {dimension_numbers = #tpu.dot_dimension_numbers<[2], [1], [1], [2], [0, 0, 0, 1, 1, 2], [0], [0]>} : vector<2x8x8xbf16>, vector<2x8x8xbf16>, vector<2x8x8xf32> -> vector<2x8x8xf32>
    "tpu.trace_stop"() : () -> ()
    %43 = vector.shape_cast %42 : vector<2x8x8xf32> to vector<16x8xf32>
    %44 = arith.truncf %43 : vector<16x8xf32> to vector<16x8xbf16>
    %c0_28 = arith.constant 0 : index
    %c0_29 = arith.constant 0 : index
    %45 = vector.load %arg18[%c0_28, %c0_29] : memref<16x32xf32, #tpu.memory_space<vmem>>, vector<16x32xf32>
    %c0_30 = arith.constant 0 : index
    %c0_31 = arith.constant 0 : index
    %c0_32 = arith.constant 0 : index
    %46 = vector.load %arg7[%c0_30, %c0_31, %c0_32] : memref<1x8x32xbf16, #tpu.memory_space<vmem>>, vector<1x8x32xbf16>
    %47 = vector.shape_cast %46 : vector<1x8x32xbf16> to vector<8x32xbf16>
    %cst_33 = arith.constant dense<0.000000e+00> : vector<16x32xf32>
    %48 = tpu.matmul %44, %47, %cst_33 {dimension_numbers = #tpu.dot_dimension_numbers<[1], [0], [0], [1], [0, 0, 1, 1], [], []>} : vector<16x8xbf16>, vector<8x32xbf16>, vector<16x32xf32> -> vector<16x32xf32>
    %49 = arith.addf %45, %48 : vector<16x32xf32>
    %c0_34 = arith.constant 0 : index
    %c0_35 = arith.constant 0 : index
    %50 = vector.load %arg18[%c0_34, %c0_35] : memref<16x32xf32, #tpu.memory_space<vmem>>, vector<16x32xf32>
    tpu.vector_store %arg18[%c0_34, %c0_35], %49 {strides = array<i32>} : memref<16x32xf32, #tpu.memory_space<vmem>>, vector<16x32xf32>,
    %c3_i32 = arith.constant 3 : i32
    %51 = arith.cmpi eq, %arg1, %c3_i32 : i32
    %52 = arith.extui %51 : i1 to i32
    %c0_i32_36 = arith.constant 0 : i32
    %53 = arith.cmpi ne, %52, %c0_i32_36 : i32
    scf.if %53 {
      %c0_37 = arith.constant 0 : index
      %c0_38 = arith.constant 0 : index
      %54 = vector.load %arg18[%c0_37, %c0_38] : memref<16x32xf32, #tpu.memory_space<vmem>>, vector<16x32xf32>
      %55 = arith.addf %54, %4 : vector<16x32xf32>
      %c0_39 = arith.constant 0 : index
      %c0_40 = arith.constant 0 : index
      %56 = vector.load %arg8[%c0_39, %c0_40] : memref<1x32xf32, #tpu.memory_space<vmem>>, vector<1x32xf32>
      %c0_41 = arith.constant 0 : index
      %c0_42 = arith.constant 0 : index
      %57 = vector.load %arg9[%c0_41, %c0_42] : memref<1x32xf32, #tpu.memory_space<vmem>>, vector<1x32xf32>
      %cst_43 = arith.constant dense<0.000000e+00> : vector<16xf32>
      %58 = vector.multi_reduction <add>, %55, %cst_43 [1] : vector<16x32xf32> to vector<16xf32>
      %59 = vector.shape_cast %58 : vector<16xf32> to vector<16x1xf32>
      %cst_44 = arith.constant 3.200000e+01 : f32
      %60 = vector.broadcast %cst_44 : f32 to vector<16x1xf32>
      %61 = arith.divf %59, %60 : vector<16x1xf32>
      %62 = vector.broadcast %61 : vector<16x1xf32> to vector<16x32xf32>
      %63 = arith.subf %55, %62 : vector<16x32xf32>
      %64 = arith.mulf %63, %63 : vector<16x32xf32>
      %cst_45 = arith.constant dense<0.000000e+00> : vector<16xf32>
      %65 = vector.multi_reduction <add>, %64, %cst_45 [1] : vector<16x32xf32> to vector<16xf32>
      %66 = vector.shape_cast %65 : vector<16xf32> to vector<16x1xf32>
      %cst_46 = arith.constant 3.200000e+01 : f32
      %67 = vector.broadcast %cst_46 : f32 to vector<16x1xf32>
      %68 = arith.divf %66, %67 : vector<16x1xf32>
      %69 = vector.broadcast %61 : vector<16x1xf32> to vector<16x32xf32>
      %70 = arith.subf %55, %69 : vector<16x32xf32>
      %cst_47 = arith.constant 9.99999974E-6 : f32
      %71 = vector.broadcast %cst_47 : f32 to vector<16x1xf32>
      %72 = arith.addf %68, %71 : vector<16x1xf32>
      %73 = math.rsqrt %72 : vector<16x1xf32>
      %74 = vector.broadcast %73 : vector<16x1xf32> to vector<16x32xf32>
      %75 = arith.mulf %70, %74 : vector<16x32xf32>
      %76 = vector.broadcast %56 : vector<1x32xf32> to vector<16x32xf32>
      %77 = arith.mulf %75, %76 : vector<16x32xf32>
      %78 = vector.broadcast %57 : vector<1x32xf32> to vector<16x32xf32>
      %79 = arith.addf %77, %78 : vector<16x32xf32>
      %80 = arith.truncf %79 : vector<16x32xf32> to vector<16x32xbf16>
      %c0_48 = arith.constant 0 : index
      %c0_49 = arith.constant 0 : index
      %81 = vector.load %arg10[%c0_48, %c0_49] : memref<32x64xbf16, #tpu.memory_space<vmem>>, vector<32x64xbf16>
      %cst_50 = arith.constant dense<0.000000e+00> : vector<16x64xf32>
      %82 = tpu.matmul %80, %81, %cst_50 {dimension_numbers = #tpu.dot_dimension_numbers<[1], [0], [0], [1], [0, 0, 1, 1], [], []>} : vector<16x32xbf16>, vector<32x64xbf16>, vector<16x64xf32> -> vector<16x64xf32>
      %c0_51 = arith.constant 0 : index
      %c0_52 = arith.constant 0 : index
      %83 = vector.load %arg11[%c0_51, %c0_52] : memref<1x64xf32, #tpu.memory_space<vmem>>, vector<1x64xf32>
      %84 = vector.broadcast %83 : vector<1x64xf32> to vector<16x64xf32>
      %85 = arith.addf %82, %84 : vector<16x64xf32>
      %cst_53 = arith.constant 0.000000e+00 : f32
      %86 = vector.broadcast %cst_53 : f32 to vector<16x64xf32>
      %87 = arith.maximumf %85, %86 : vector<16x64xf32>
      %88 = arith.truncf %87 : vector<16x64xf32> to vector<16x64xbf16>
      %c0_54 = arith.constant 0 : index
      %c0_55 = arith.constant 0 : index
      %89 = vector.load %arg12[%c0_54, %c0_55] : memref<64x32xbf16, #tpu.memory_space<vmem>>, vector<64x32xbf16>
      %cst_56 = arith.constant dense<0.000000e+00> : vector<16x32xf32>
      %90 = tpu.matmul %88, %89, %cst_56 {dimension_numbers = #tpu.dot_dimension_numbers<[1], [0], [0], [1], [0, 0, 1, 1], [], []>} : vector<16x64xbf16>, vector<64x32xbf16>, vector<16x32xf32> -> vector<16x32xf32>
      %c0_57 = arith.constant 0 : index
      %c0_58 = arith.constant 0 : index
      %91 = vector.load %arg13[%c0_57, %c0_58] : memref<1x32xf32, #tpu.memory_space<vmem>>, vector<1x32xf32>
      %92 = vector.broadcast %91 : vector<1x32xf32> to vector<16x32xf32>
      %93 = arith.addf %90, %92 : vector<16x32xf32>
      %94 = arith.addf %93, %79 : vector<16x32xf32>
      %c0_59 = arith.constant 0 : index
      %c0_60 = arith.constant 0 : index
      %95 = vector.load %arg14[%c0_59, %c0_60] : memref<1x32xf32, #tpu.memory_space<vmem>>, vector<1x32xf32>
      %c0_61 = arith.constant 0 : index
      %c0_62 = arith.constant 0 : index
      %96 = vector.load %arg15[%c0_61, %c0_62] : memref<1x32xf32, #tpu.memory_space<vmem>>, vector<1x32xf32>
      %cst_63 = arith.constant dense<0.000000e+00> : vector<16xf32>
      %97 = vector.multi_reduction <add>, %94, %cst_63 [1] : vector<16x32xf32> to vector<16xf32>
      %98 = vector.shape_cast %97 : vector<16xf32> to vector<16x1xf32>
      %cst_64 = arith.constant 3.200000e+01 : f32
      %99 = vector.broadcast %cst_64 : f32 to vector<16x1xf32>
      %100 = arith.divf %98, %99 : vector<16x1xf32>
      %101 = vector.broadcast %100 : vector<16x1xf32> to vector<16x32xf32>
      %102 = arith.subf %94, %101 : vector<16x32xf32>
      %103 = arith.mulf %102, %102 : vector<16x32xf32>
      %cst_65 = arith.constant dense<0.000000e+00> : vector<16xf32>
      %104 = vector.multi_reduction <add>, %103, %cst_65 [1] : vector<16x32xf32> to vector<16xf32>
      %105 = vector.shape_cast %104 : vector<16xf32> to vector<16x1xf32>
      %cst_66 = arith.constant 3.200000e+01 : f32
      %106 = vector.broadcast %cst_66 : f32 to vector<16x1xf32>
      %107 = arith.divf %105, %106 : vector<16x1xf32>
      %108 = vector.broadcast %100 : vector<16x1xf32> to vector<16x32xf32>
      %109 = arith.subf %94, %108 : vector<16x32xf32>
      %cst_67 = arith.constant 9.99999974E-6 : f32
      %110 = vector.broadcast %cst_67 : f32 to vector<16x1xf32>
      %111 = arith.addf %107, %110 : vector<16x1xf32>
      %112 = math.rsqrt %111 : vector<16x1xf32>
      %113 = vector.broadcast %112 : vector<16x1xf32> to vector<16x32xf32>
      %114 = arith.mulf %109, %113 : vector<16x32xf32>
      %115 = vector.broadcast %95 : vector<1x32xf32> to vector<16x32xf32>
      %116 = arith.mulf %114, %115 : vector<16x32xf32>
      %117 = vector.broadcast %96 : vector<1x32xf32> to vector<16x32xf32>
      %118 = arith.addf %116, %117 : vector<16x32xf32>
      %119 = vector.shape_cast %118 : vector<16x32xf32> to vector<2x8x32xf32>
      %c0_68 = arith.constant 0 : index
      %c0_69 = arith.constant 0 : index
      %c0_70 = arith.constant 0 : index
      %120 = vector.load %arg16[%c0_68, %c0_69, %c0_70] : memref<2x8x32xf32, #tpu.memory_space<vmem>>, vector<2x8x32xf32>
      tpu.vector_store %arg16[%c0_68, %c0_69, %c0_70], %119 {strides = array<i32>} : memref<2x8x32xf32, #tpu.memory_space<vmem>>, vector<2x8x32xf32>,
    } else {
    }
    return
  }
  func.func @transform_0(%arg0: i32, %arg1: i32) -> (i32, i32, i32) {
    %c0_i32 = arith.constant 0 : i32
    %c0_i32_0 = arith.constant 0 : i32
    %c0_i32_1 = arith.constant 0 : i32
    return %arg0, %c0_i32, %c0_i32_0 : i32, i32, i32
  }
  func.func @transform_1(%arg0: i32, %arg1: i32) -> (i32, i32, i32) {
    %c0_i32 = arith.constant 0 : i32
    %c0_i32_0 = arith.constant 0 : i32
    %c0_i32_1 = arith.constant 0 : i32
    return %arg0, %c0_i32, %c0_i32_0 : i32, i32, i32
  }
  func.func @transform_2(%arg0: i32, %arg1: i32) -> (i32, i32, i32) {
    %c0_i32 = arith.constant 0 : i32
    %c0_i32_0 = arith.constant 0 : i32
    %c0_i32_1 = arith.constant 0 : i32
    return %arg1, %c0_i32, %c0_i32_0 : i32, i32, i32
  }
  func.func @transform_3(%arg0: i32, %arg1: i32) -> (i32, i32, i32) {
    %c0_i32 = arith.constant 0 : i32
    %c0_i32_0 = arith.constant 0 : i32
    %c0_i32_1 = arith.constant 0 : i32
    return %arg1, %c0_i32, %c0_i32_0 : i32, i32, i32
  }
  func.func @transform_4(%arg0: i32, %arg1: i32) -> (i32, i32, i32) {
    %c0_i32 = arith.constant 0 : i32
    %c0_i32_0 = arith.constant 0 : i32
    %c0_i32_1 = arith.constant 0 : i32
    return %arg1, %c0_i32, %c0_i32_0 : i32, i32, i32
  }
  func.func @transform_5(%arg0: i32, %arg1: i32) -> (i32, i32, i32) {
    %c0_i32 = arith.constant 0 : i32
    %c0_i32_0 = arith.constant 0 : i32
    %c0_i32_1 = arith.constant 0 : i32
    return %arg1, %c0_i32, %c0_i32_0 : i32, i32, i32
  }
  func.func @transform_6(%arg0: i32, %arg1: i32) -> (i32, i32) {
    %c0_i32 = arith.constant 0 : i32
    %c0_i32_0 = arith.constant 0 : i32
    %c0_i32_1 = arith.constant 0 : i32
    return %c0_i32, %c0_i32_0 : i32, i32
  }
  func.func @transform_7(%arg0: i32, %arg1: i32) -> (i32, i32) {
    %c0_i32 = arith.constant 0 : i32
    %c0_i32_0 = arith.constant 0 : i32
    %c0_i32_1 = arith.constant 0 : i32
    return %c0_i32, %c0_i32_0 : i32, i32
  }
  func.func @transform_8(%arg0: i32, %arg1: i32) -> (i32, i32) {
    %c0_i32 = arith.constant 0 : i32
    %c0_i32_0 = arith.constant 0 : i32
    %c0_i32_1 = arith.constant 0 : i32
    return %c0_i32, %c0_i32_0 : i32, i32
  }
  func.func @transform_9(%arg0: i32, %arg1: i32) -> (i32, i32) {
    %c0_i32 = arith.constant 0 : i32
    %c0_i32_0 = arith.constant 0 : i32
    %c0_i32_1 = arith.constant 0 : i32
    return %c0_i32, %c0_i32_0 : i32, i32
  }
  func.func @transform_10(%arg0: i32, %arg1: i32) -> (i32, i32) {
    %c0_i32 = arith.constant 0 : i32
    %c0_i32_0 = arith.constant 0 : i32
    %c0_i32_1 = arith.constant 0 : i32
    return %c0_i32, %c0_i32_0 : i32, i32
  }
  func.func @transform_11(%arg0: i32, %arg1: i32) -> (i32, i32) {
    %c0_i32 = arith.constant 0 : i32
    %c0_i32_0 = arith.constant 0 : i32
    %c0_i32_1 = arith.constant 0 : i32
    return %c0_i32, %c0_i32_0 : i32, i32
  }
  func.func @transform_12(%arg0: i32, %arg1: i32) -> (i32, i32) {
    %c0_i32 = arith.constant 0 : i32
    %c0_i32_0 = arith.constant 0 : i32
    %c0_i32_1 = arith.constant 0 : i32
    return %c0_i32, %c0_i32_0 : i32, i32
  }
  func.func @transform_13(%arg0: i32, %arg1: i32) -> (i32, i32) {
    %c0_i32 = arith.constant 0 : i32
    %c0_i32_0 = arith.constant 0 : i32
    %c0_i32_1 = arith.constant 0 : i32
    return %c0_i32, %c0_i32_0 : i32, i32
  }
  func.func @transform_14(%arg0: i32, %arg1: i32) -> (i32, i32, i32) {
    %c0_i32 = arith.constant 0 : i32
    %c0_i32_0 = arith.constant 0 : i32
    %c0_i32_1 = arith.constant 0 : i32
    return %arg0, %c0_i32, %c0_i32_0 : i32, i32, i32
  }
  func.func @transform_15(%arg0: i32, %arg1: i32) -> (i32, i32, i32, i32) {
    %c0_i32 = arith.constant 0 : i32
    %c0_i32_0 = arith.constant 0 : i32
    %c0_i32_1 = arith.constant 0 : i32
    return %arg0, %arg1, %c0_i32, %c0_i32_0 : i32, i32, i32, i32
  }
}

</mosaic_0001>

<llo_original>
// kernel: tpu_custom_call.1
$region0: #{tpu_custom_call.1}
  #allocation0 [shape = 'u32[]', space=smem, size = 0x4, offset = 0x4, fixed_abs, tag = 'smem constant byte address 0x4 - core index']
  #allocation1 [shape = 'u32[144,128]{1,0:T(1,128)}', space=vmem, size = 0x12000, scoped, tag = 'internal scratch']
  #allocation2 [shape = 'f32[16,32]{1,0:T(8,128)}', space=vmem, size = 0x2000, scoped, tag = 'scratch operand']
  %s0 = inlined_call_operand.vmem [shape: f32[2,8,32], index: 0, kind: input, shape index: {}]
  %s1 = inlined_call_operand.vmem [shape: f32[2,8,8], index: 1, kind: input, shape index: {}]
  %s2 = inlined_call_operand.vmem [shape: bf16[4,32,8], index: 2, kind: input, shape index: {}]
  %s3 = inlined_call_operand.vmem [shape: bf16[4,32,8], index: 3, kind: input, shape index: {}]
  %s4 = inlined_call_operand.vmem [shape: bf16[4,32,8], index: 4, kind: input, shape index: {}]
  %s5 = inlined_call_operand.vmem [shape: bf16[4,8,32], index: 5, kind: input, shape index: {}]
  %s6 = inlined_call_operand.vmem [shape: f32[1,32], index: 6, kind: input, shape index: {}]
  %s7 = inlined_call_operand.vmem [shape: f32[1,32], index: 7, kind: input, shape index: {}]
  %s8 = inlined_call_operand.vmem [shape: bf16[32,64], index: 8, kind: input, shape index: {}]
  %s9 = inlined_call_operand.vmem [shape: f32[1,64], index: 9, kind: input, shape index: {}]
  %s10 = inlined_call_operand.vmem [shape: bf16[64,32], index: 10, kind: input, shape index: {}]
  %s11 = inlined_call_operand.vmem [shape: f32[1,32], index: 11, kind: input, shape index: {}]
  %s12 = inlined_call_operand.vmem [shape: f32[1,32], index: 12, kind: input, shape index: {}]
  %s13 = inlined_call_operand.vmem [shape: f32[1,32], index: 13, kind: input, shape index: {}]
  %s14 = inlined_call_operand.hbm [shape: f32[2,8,32], index: 14, kind: output, shape index: {0}]
  %s15 = inlined_call_operand.hbm [shape: f32[2,4,8,8], index: 15, kind: output, shape index: {1}]
  %16 = xla_tuple %s14, %s15
  %s17 = sld [smem:[#allocation0]]
  $region105: #{tpu_custom_call.1} parent=0
    _
  %s19 = ssub.s32 1, %s17
  %s20 = scalar_select 0, %s19, %s17
  $region1: #{tpu_custom_call.1} parent=0
    #allocation3 [shape = 'u8[8192]{0}', space=vmem, size = 0x2000, scoped, tag = 'output window, operand 0, single buffered']
    #allocation4 [shape = 's32[2]{0}', space=sflag, size = 0x8, scoped, tag = 'scoped memory for tpu_custom_call.1']
    #allocation5 [shape = 'u8[16384]{0}', space=vmem, size = 0x4000, scoped, tag = 'output window, operand 1']
    #allocation6 [shape = 's32[2]{0}', space=sflag, size = 0x8, scoped, tag = 'scoped memory for tpu_custom_call.1']
    %21 = vsyncpa [#allocation4], 0
    %22 = vsyncpa [#allocation6], 0
    %s23 = scalar_lea.sflag [#allocation6], 1
    %24 = vsyncpa %s23, 0
    loop: start=0, step=1, limit=6
    $region2: #{tpu_custom_call.1} parent=1 // loop_pre_header
      _
    $region3: #{tpu_custom_call.1} parent=1 // loop_header
      %s26 = sphi 0, %s30
      %p27 = scmp.ge.s32.totalorder %s26, 6
      %s33 = sphi 0, %s45
      %s34 = sphi 0, %s41
      %s35 = sphi 0, %s33
      %s36 = sphi 0, %s34
      %s37 = sphi 0, %s35
      %s38 = sphi 0, %s36
      %s48 = sphi 0, %s50
      %s51 = sphi 0, %s48
      %s52 = sphi 0, %s51
      %s68 = sphi 0, %s52
      %s74 = sphi 0, %s76
      %s77 = sphi 0, %s74
      %s78 = sphi 0, %s77
      %s94 = sphi 0, %s78
      %s100 = sphi 0, %s102
      %s103 = sphi 0, %s100
      %s104 = sphi 0, %s103
      %s120 = sphi 0, %s104
      %s126 = sphi 0, %s128
      %s129 = sphi 0, %s126
      %s130 = sphi 0, %s129
      %s146 = sphi 0, %s130
      %s152 = sphi 0, %s154
      %s155 = sphi 0, %s152
      %s156 = sphi 0, %s155
      %s172 = sphi 0, %s156
      %s178 = sphi 0, %s180
      %s181 = sphi 0, %s178
      %s182 = sphi 0, %s181
      %s198 = sphi 0, %s182
      %s202 = sphi 0, %s202
      %s204 = sphi 0, %s202
      %s205 = sphi 0, %s204
      %s219 = sphi 0, %s205
      %s223 = sphi 0, %s223
      %s225 = sphi 0, %s223
      %s226 = sphi 0, %s225
      %s240 = sphi 0, %s226
      %s244 = sphi 0, %s244
      %s246 = sphi 0, %s244
      %s247 = sphi 0, %s246
      %s261 = sphi 0, %s247
      %s265 = sphi 0, %s265
      %s267 = sphi 0, %s265
      %s268 = sphi 0, %s267
      %s282 = sphi 0, %s268
      %s286 = sphi 0, %s286
      %s288 = sphi 0, %s286
      %s289 = sphi 0, %s288
      %s303 = sphi 0, %s289
      %s307 = sphi 0, %s307
      %s309 = sphi 0, %s307
      %s310 = sphi 0, %s309
      %s324 = sphi 0, %s310
      %s328 = sphi 0, %s328
      %s330 = sphi 0, %s328
      %s331 = sphi 0, %s330
      %s345 = sphi 0, %s331
      %s349 = sphi 0, %s349
      %s351 = sphi 0, %s349
      %s352 = sphi 0, %s351
      %s366 = sphi 0, %s352
      %s372 = sphi 0, %s374
      %s375 = sphi 0, %s372
      %s376 = sphi 0, %s375
      %s392 = sphi 0, %s376
      %s400 = sphi 0, %s402
      %s403 = sphi 0, %s400
      %s404 = sphi 0, %s403
      %s420 = sphi 0, %s404
    $region4: #{tpu_custom_call.1} parent=1 // loop_header_branch
      %29 = sbr.rel (%p27) target = $region8
    $region5: #{tpu_custom_call.1} parent=1 // loop_body
      %s31 = ssub.s32 %s26, 1
      %s32 = ssub.s32 %s26, 2
      %s39 = sadd.s32 1, %s34
      %p40 = scmp.ge.s32.totalorder %s39, 4
      %s41 = scalar_select %p40, 0, %s39
      %s42 = sadd.s32 1, %s33
      %s43 = scalar_select %p40, %s42, %s33
      %p44 = scmp.ge.s32.totalorder %s43, 1
      %s45 = scalar_select %p44, 0, %s43
      %s46 = ssub.s32 %s33, %s45
      %p47 = scmp.eq.s32.totalorder %s46, 0
      %s49 = sadd.s32 %s48, 1
      %s50 = scalar_select %p47, %s48, %s49
      %p53 = pneg %p47
      %p54 = scmp.eq.s32.totalorder %s26, 3
      %p55 = por %p53, %p54
      %p56 = scmp.ne.s32.totalorder %s48, %s51
      %p57 = scmp.eq.s32.totalorder %s26, 0
      %p58 = por %p56, %p57
      %p59 = scmp.ne.s32.totalorder %s48, %s51
      %p60 = scmp.eq.s32.totalorder %s31, 3
      %p61 = por %p59, %p60
      %p62 = scmp.ne.s32.totalorder %s51, %s52
      %p63 = scmp.eq.s32.totalorder %s31, 0
      %p64 = por %p62, %p63
      %p65 = scmp.ne.s32.totalorder %s51, %s52
      %p66 = scmp.eq.s32.totalorder %s32, 3
      %p67 = por %p65, %p66
      %p69 = scmp.ne.s32.totalorder %s52, %s68
      %p70 = scmp.eq.s32.totalorder %s32, 0
      %p71 = por %p69, %p70
      %s72 = ssub.s32 %s33, %s45
      %p73 = scmp.eq.s32.totalorder %s72, 0
      %s75 = sadd.s32 %s74, 1
      %s76 = scalar_select %p73, %s74, %s75
      %p79 = pneg %p73
      %p80 = scmp.eq.s32.totalorder %s26, 3
      %p81 = por %p79, %p80
      %p82 = scmp.ne.s32.totalorder %s74, %s77
      %p83 = scmp.eq.s32.totalorder %s26, 0
      %p84 = por %p82, %p83
      %p85 = scmp.ne.s32.totalorder %s74, %s77
      %p86 = scmp.eq.s32.totalorder %s31, 3
      %p87 = por %p85, %p86
      %p88 = scmp.ne.s32.totalorder %s77, %s78
      %p89 = scmp.eq.s32.totalorder %s31, 0
      %p90 = por %p88, %p89
      %p91 = scmp.ne.s32.totalorder %s77, %s78
      %p92 = scmp.eq.s32.totalorder %s32, 3
      %p93 = por %p91, %p92
      %p95 = scmp.ne.s32.totalorder %s78, %s94
      %p96 = scmp.eq.s32.totalorder %s32, 0
      %p97 = por %p95, %p96
      %s98 = ssub.s32 %s34, %s41
      %p99 = scmp.eq.s32.totalorder %s98, 0
      %s101 = sadd.s32 %s100, 1
      %s102 = scalar_select %p99, %s100, %s101
      %p105 = pneg %p99
      %p106 = scmp.eq.s32.totalorder %s26, 3
      %p107 = por %p105, %p106
      %p108 = scmp.ne.s32.totalorder %s100, %s103
      %p109 = scmp.eq.s32.totalorder %s26, 0
      %p110 = por %p108, %p109
      %p111 = scmp.ne.s32.totalorder %s100, %s103
      %p112 = scmp.eq.s32.totalorder %s31, 3
      %p113 = por %p111, %p112
      %p114 = scmp.ne.s32.totalorder %s103, %s104
      %p115 = scmp.eq.s32.totalorder %s31, 0
      %p116 = por %p114, %p115
      %p117 = scmp.ne.s32.totalorder %s103, %s104
      %p118 = scmp.eq.s32.totalorder %s32, 3
      %p119 = por %p117, %p118
      %p121 = scmp.ne.s32.totalorder %s104, %s120
      %p122 = scmp.eq.s32.totalorder %s32, 0
      %p123 = por %p121, %p122
      %s124 = ssub.s32 %s34, %s41
      %p125 = scmp.eq.s32.totalorder %s124, 0
      %s127 = sadd.s32 %s126, 1
      %s128 = scalar_select %p125, %s126, %s127
      %p131 = pneg %p125
      %p132 = scmp.eq.s32.totalorder %s26, 3
      %p133 = por %p131, %p132
      %p134 = scmp.ne.s32.totalorder %s126, %s129
      %p135 = scmp.eq.s32.totalorder %s26, 0
      %p136 = por %p134, %p135
      %p137 = scmp.ne.s32.totalorder %s126, %s129
      %p138 = scmp.eq.s32.totalorder %s31, 3
      %p139 = por %p137, %p138
      %p140 = scmp.ne.s32.totalorder %s129, %s130
      %p141 = scmp.eq.s32.totalorder %s31, 0
      %p142 = por %p140, %p141
      %p143 = scmp.ne.s32.totalorder %s129, %s130
      %p144 = scmp.eq.s32.totalorder %s32, 3
      %p145 = por %p143, %p144
      %p147 = scmp.ne.s32.totalorder %s130, %s146
      %p148 = scmp.eq.s32.totalorder %s32, 0
      %p149 = por %p147, %p148
      %s150 = ssub.s32 %s34, %s41
      %p151 = scmp.eq.s32.totalorder %s150, 0
      %s153 = sadd.s32 %s152, 1
      %s154 = scalar_select %p151, %s152, %s153
      %p157 = pneg %p151
      %p158 = scmp.eq.s32.totalorder %s26, 3
      %p159 = por %p157, %p158
      %p160 = scmp.ne.s32.totalorder %s152, %s155
      %p161 = scmp.eq.s32.totalorder %s26, 0
      %p162 = por %p160, %p161
      %p163 = scmp.ne.s32.totalorder %s152, %s155
      %p164 = scmp.eq.s32.totalorder %s31, 3
      %p165 = por %p163, %p164
      %p166 = scmp.ne.s32.totalorder %s155, %s156
      %p167 = scmp.eq.s32.totalorder %s31, 0
      %p168 = por %p166, %p167
      %p169 = scmp.ne.s32.totalorder %s155, %s156
      %p170 = scmp.eq.s32.totalorder %s32, 3
      %p171 = por %p169, %p170
      %p173 = scmp.ne.s32.totalorder %s156, %s172
      %p174 = scmp.eq.s32.totalorder %s32, 0
      %p175 = por %p173, %p174
      %s176 = ssub.s32 %s34, %s41
      %p177 = scmp.eq.s32.totalorder %s176, 0
      %s179 = sadd.s32 %s178, 1
      %s180 = scalar_select %p177, %s178, %s179
      %p183 = pneg %p177
      %p184 = scmp.eq.s32.totalorder %s26, 3
      %p185 = por %p183, %p184
      %p186 = scmp.ne.s32.totalorder %s178, %s181
      %p187 = scmp.eq.s32.totalorder %s26, 0
      %p188 = por %p186, %p187
      %p189 = scmp.ne.s32.totalorder %s178, %s181
      %p190 = scmp.eq.s32.totalorder %s31, 3
      %p191 = por %p189, %p190
      %p192 = scmp.ne.s32.totalorder %s181, %s182
      %p193 = scmp.eq.s32.totalorder %s31, 0
      %p194 = por %p192, %p193
      %p195 = scmp.ne.s32.totalorder %s181, %s182
      %p196 = scmp.eq.s32.totalorder %s32, 3
      %p197 = por %p195, %p196
      %p199 = scmp.ne.s32.totalorder %s182, %s198
      %p200 = scmp.eq.s32.totalorder %s32, 0
      %p201 = por %p199, %p200
      %s203 = sadd.s32 %s202, 1
      %p206 = scmp.eq.s32.totalorder %s26, 3
      %p207 = scmp.ne.s32.totalorder %s202, %s204
      %p208 = scmp.eq.s32.totalorder %s26, 0
      %p209 = por %p207, %p208
      %p210 = scmp.ne.s32.totalorder %s202, %s204
      %p211 = scmp.eq.s32.totalorder %s31, 3
      %p212 = por %p210, %p211
      %p213 = scmp.ne.s32.totalorder %s204, %s205
      %p214 = scmp.eq.s32.totalorder %s31, 0
      %p215 = por %p213, %p214
      %p216 = scmp.ne.s32.totalorder %s204, %s205
      %p217 = scmp.eq.s32.totalorder %s32, 3
      %p218 = por %p216, %p217
      %p220 = scmp.ne.s32.totalorder %s205, %s219
      %p221 = scmp.eq.s32.totalorder %s32, 0
      %p222 = por %p220, %p221
      %s224 = sadd.s32 %s223, 1
      %p227 = scmp.eq.s32.totalorder %s26, 3
      %p228 = scmp.ne.s32.totalorder %s223, %s225
      %p229 = scmp.eq.s32.totalorder %s26, 0
      %p230 = por %p228, %p229
      %p231 = scmp.ne.s32.totalorder %s223, %s225
      %p232 = scmp.eq.s32.totalorder %s31, 3
      %p233 = por %p231, %p232
      %p234 = scmp.ne.s32.totalorder %s225, %s226
      %p235 = scmp.eq.s32.totalorder %s31, 0
      %p236 = por %p234, %p235
      %p237 = scmp.ne.s32.totalorder %s225, %s226
      %p238 = scmp.eq.s32.totalorder %s32, 3
      %p239 = por %p237, %p238
      %p241 = scmp.ne.s32.totalorder %s226, %s240
      %p242 = scmp.eq.s32.totalorder %s32, 0
      %p243 = por %p241, %p242
      %s245 = sadd.s32 %s244, 1
      %p248 = scmp.eq.s32.totalorder %s26, 3
      %p249 = scmp.ne.s32.totalorder %s244, %s246
      %p250 = scmp.eq.s32.totalorder %s26, 0
      %p251 = por %p249, %p250
      %p252 = scmp.ne.s32.totalorder %s244, %s246
      %p253 = scmp.eq.s32.totalorder %s31, 3
      %p254 = por %p252, %p253
      %p255 = scmp.ne.s32.totalorder %s246, %s247
      %p256 = scmp.eq.s32.totalorder %s31, 0
      %p257 = por %p255, %p256
      %p258 = scmp.ne.s32.totalorder %s246, %s247
      %p259 = scmp.eq.s32.totalorder %s32, 3
      %p260 = por %p258, %p259
      %p262 = scmp.ne.s32.totalorder %s247, %s261
      %p263 = scmp.eq.s32.totalorder %s32, 0
      %p264 = por %p262, %p263
      %s266 = sadd.s32 %s265, 1
      %p269 = scmp.eq.s32.totalorder %s26, 3
      %p270 = scmp.ne.s32.totalorder %s265, %s267
      %p271 = scmp.eq.s32.totalorder %s26, 0
      %p272 = por %p270, %p271
      %p273 = scmp.ne.s32.totalorder %s265, %s267
      %p274 = scmp.eq.s32.totalorder %s31, 3
      %p275 = por %p273, %p274
      %p276 = scmp.ne.s32.totalorder %s267, %s268
      %p277 = scmp.eq.s32.totalorder %s31, 0
      %p278 = por %p276, %p277
      %p279 = scmp.ne.s32.totalorder %s267, %s268
      %p280 = scmp.eq.s32.totalorder %s32, 3
      %p281 = por %p279, %p280
      %p283 = scmp.ne.s32.totalorder %s268, %s282
      %p284 = scmp.eq.s32.totalorder %s32, 0
      %p285 = por %p283, %p284
      %s287 = sadd.s32 %s286, 1
      %p290 = scmp.eq.s32.totalorder %s26, 3
      %p291 = scmp.ne.s32.totalorder %s286, %s288
      %p292 = scmp.eq.s32.totalorder %s26, 0
      %p293 = por %p291, %p292
      %p294 = scmp.ne.s32.totalorder %s286, %s288
      %p295 = scmp.eq.s32.totalorder %s31, 3
      %p296 = por %p294, %p295
      %p297 = scmp.ne.s32.totalorder %s288, %s289
      %p298 = scmp.eq.s32.totalorder %s31, 0
      %p299 = por %p297, %p298
      %p300 = scmp.ne.s32.totalorder %s288, %s289
      %p301 = scmp.eq.s32.totalorder %s32, 3
      %p302 = por %p300, %p301
      %p304 = scmp.ne.s32.totalorder %s289, %s303
      %p305 = scmp.eq.s32.totalorder %s32, 0
      %p306 = por %p304, %p305
      %s308 = sadd.s32 %s307, 1
      %p311 = scmp.eq.s32.totalorder %s26, 3
      %p312 = scmp.ne.s32.totalorder %s307, %s309
      %p313 = scmp.eq.s32.totalorder %s26, 0
      %p314 = por %p312, %p313
      %p315 = scmp.ne.s32.totalorder %s307, %s309
      %p316 = scmp.eq.s32.totalorder %s31, 3
      %p317 = por %p315, %p316
      %p318 = scmp.ne.s32.totalorder %s309, %s310
      %p319 = scmp.eq.s32.totalorder %s31, 0
      %p320 = por %p318, %p319
      %p321 = scmp.ne.s32.totalorder %s309, %s310
      %p322 = scmp.eq.s32.totalorder %s32, 3
      %p323 = por %p321, %p322
      %p325 = scmp.ne.s32.totalorder %s310, %s324
      %p326 = scmp.eq.s32.totalorder %s32, 0
      %p327 = por %p325, %p326
      %s329 = sadd.s32 %s328, 1
      %p332 = scmp.eq.s32.totalorder %s26, 3
      %p333 = scmp.ne.s32.totalorder %s328, %s330
      %p334 = scmp.eq.s32.totalorder %s26, 0
      %p335 = por %p333, %p334
      %p336 = scmp.ne.s32.totalorder %s328, %s330
      %p337 = scmp.eq.s32.totalorder %s31, 3
      %p338 = por %p336, %p337
      %p339 = scmp.ne.s32.totalorder %s330, %s331
      %p340 = scmp.eq.s32.totalorder %s31, 0
      %p341 = por %p339, %p340
      %p342 = scmp.ne.s32.totalorder %s330, %s331
      %p343 = scmp.eq.s32.totalorder %s32, 3
      %p344 = por %p342, %p343
      %p346 = scmp.ne.s32.totalorder %s331, %s345
      %p347 = scmp.eq.s32.totalorder %s32, 0
      %p348 = por %p346, %p347
      %s350 = sadd.s32 %s349, 1
      %p353 = scmp.eq.s32.totalorder %s26, 3
      %p354 = scmp.ne.s32.totalorder %s349, %s351
      %p355 = scmp.eq.s32.totalorder %s26, 0
      %p356 = por %p354, %p355
      %p357 = scmp.ne.s32.totalorder %s349, %s351
      %p358 = scmp.eq.s32.totalorder %s31, 3
      %p359 = por %p357, %p358
      %p360 = scmp.ne.s32.totalorder %s351, %s352
      %p361 = scmp.eq.s32.totalorder %s31, 0
      %p362 = por %p360, %p361
      %p363 = scmp.ne.s32.totalorder %s351, %s352
      %p364 = scmp.eq.s32.totalorder %s32, 3
      %p365 = por %p363, %p364
      %p367 = scmp.ne.s32.totalorder %s352, %s366
      %p368 = scmp.eq.s32.totalorder %s32, 0
      %p369 = por %p367, %p368
      %s370 = ssub.s32 %s33, %s45
      %p371 = scmp.eq.s32.totalorder %s370, 0
      %s373 = sadd.s32 %s372, 1
      %s374 = scalar_select %p371, %s372, %s373
      %p377 = pneg %p371
      %p378 = scmp.eq.s32.totalorder %s26, 3
      %p379 = por %p377, %p378
      %p380 = scmp.ne.s32.totalorder %s372, %s375
      %p381 = scmp.eq.s32.totalorder %s26, 0
      %p382 = por %p380, %p381
      %p383 = scmp.ne.s32.totalorder %s372, %s375
      %p384 = scmp.eq.s32.totalorder %s31, 3
      %p385 = por %p383, %p384
      %p386 = scmp.ne.s32.totalorder %s375, %s376
      %p387 = scmp.eq.s32.totalorder %s31, 0
      %p388 = por %p386, %p387
      %p389 = scmp.ne.s32.totalorder %s375, %s376
      %p390 = scmp.eq.s32.totalorder %s32, 3
      %p391 = por %p389, %p390
      %p393 = scmp.ne.s32.totalorder %s376, %s392
      %p394 = scmp.eq.s32.totalorder %s32, 0
      %p395 = por %p393, %p394
      %s396 = ssub.s32 %s33, %s45
      %s397 = ssub.s32 %s34, %s41
      %s398 = sor.u32 %s396, %s397
      %p399 = scmp.eq.s32.totalorder %s398, 0
      %s401 = sadd.s32 %s400, 1
      %s402 = scalar_select %p399, %s400, %s401
      %p405 = pneg %p399
      %p406 = scmp.eq.s32.totalorder %s26, 3
      %p407 = por %p405, %p406
      %p408 = scmp.ne.s32.totalorder %s400, %s403
      %p409 = scmp.eq.s32.totalorder %s26, 0
      %p410 = por %p408, %p409
      %p411 = scmp.ne.s32.totalorder %s400, %s403
      %p412 = scmp.eq.s32.totalorder %s31, 3
      %p413 = por %p411, %p412
      %p414 = scmp.ne.s32.totalorder %s403, %s404
      %p415 = scmp.eq.s32.totalorder %s31, 0
      %p416 = por %p414, %p415
      %p417 = scmp.ne.s32.totalorder %s403, %s404
      %p418 = scmp.eq.s32.totalorder %s32, 3
      %p419 = por %p417, %p418
      %p421 = scmp.ne.s32.totalorder %s404, %s420
      %p422 = scmp.eq.s32.totalorder %s32, 0
      %p423 = por %p421, %p422
      %p424 = scmp.le.s32.totalorder 1, %s26
      %p425 = scmp.lt.s32.totalorder %s26, 5
      %p426 = pnand %p424, %p425
      %p427 = pneg %p426
      // Predicated region
      $region9: #{tpu_custom_call.1} parent=5 // pred_check
        _
      $region10: #{tpu_custom_call.1} parent=5 // pred_check_branch
        %429 = sbr.rel (%p426) target = $region12
      $region11: #{tpu_custom_call.1} parent=5 // pred_region
        %s430 = ssub.s32 %s26, 1
        // Predicated region
        $region13: #{tpu_custom_call.1} parent=11 // pred_check
          %p431 = pneg %p64
        $region14: #{tpu_custom_call.1} parent=11 // pred_check_branch
          %433 = sbr.rel (%p431) target = $region16
        $region15: #{tpu_custom_call.1} parent=11 // pred_region
          %s434 = smul.u32 2, %s35
          %p435 = scmp.lt.s32.totalorder %s434, 1
          %s436 = scalar_select %p435, %s434, 1
          %s437 = smul.addr %s436, 8
          %s438 = scalar_lea.vmem %s0, %s437
          %s439 = smul.u32 2, %s35
        $region16: #{tpu_custom_call.1} parent=11 // pred_fallthru
          _
        // Predicated region
        $region17: #{tpu_custom_call.1} parent=11 // pred_check
          %p440 = pneg %p90
        $region18: #{tpu_custom_call.1} parent=11 // pred_check_branch
          %442 = sbr.rel (%p440) target = $region20
        $region19: #{tpu_custom_call.1} parent=11 // pred_region
          %s443 = smul.u32 2, %s35
          %p444 = scmp.lt.s32.totalorder %s443, 1
          %s445 = scalar_select %p444, %s443, 1
          %s446 = smul.addr %s445, 8
          %s447 = scalar_lea.vmem %s1, %s446
          %s448 = smul.u32 2, %s35
        $region20: #{tpu_custom_call.1} parent=11 // pred_fallthru
          _
        // Predicated region
        $region21: #{tpu_custom_call.1} parent=11 // pred_check
          %p449 = pneg %p215
        $region22: #{tpu_custom_call.1} parent=11 // pred_check_branch
          %451 = sbr.rel (%p449) target = $region24
        $region23: #{tpu_custom_call.1} parent=11 // pred_region
          _
        $region24: #{tpu_custom_call.1} parent=11 // pred_fallthru
          _
        // Predicated region
        $region25: #{tpu_custom_call.1} parent=11 // pred_check
          %p452 = pneg %p236
        $region26: #{tpu_custom_call.1} parent=11 // pred_check_branch
          %454 = sbr.rel (%p452) target = $region28
        $region27: #{tpu_custom_call.1} parent=11 // pred_region
          _
        $region28: #{tpu_custom_call.1} parent=11 // pred_fallthru
          _
        // Predicated region
        $region29: #{tpu_custom_call.1} parent=11 // pred_check
          %p455 = pneg %p257
        $region30: #{tpu_custom_call.1} parent=11 // pred_check_branch
          %457 = sbr.rel (%p455) target = $region32
        $region31: #{tpu_custom_call.1} parent=11 // pred_region
          _
        $region32: #{tpu_custom_call.1} parent=11 // pred_fallthru
          _
        // Predicated region
        $region33: #{tpu_custom_call.1} parent=11 // pred_check
          %p458 = pneg %p278
        $region34: #{tpu_custom_call.1} parent=11 // pred_check_branch
          %460 = sbr.rel (%p458) target = $region36
        $region35: #{tpu_custom_call.1} parent=11 // pred_region
          _
        $region36: #{tpu_custom_call.1} parent=11 // pred_fallthru
          _
        // Predicated region
        $region37: #{tpu_custom_call.1} parent=11 // pred_check
          %p461 = pneg %p299
        $region38: #{tpu_custom_call.1} parent=11 // pred_check_branch
          %463 = sbr.rel (%p461) target = $region40
        $region39: #{tpu_custom_call.1} parent=11 // pred_region
          _
        $region40: #{tpu_custom_call.1} parent=11 // pred_fallthru
          _
        // Predicated region
        $region41: #{tpu_custom_call.1} parent=11 // pred_check
          %p464 = pneg %p320
        $region42: #{tpu_custom_call.1} parent=11 // pred_check_branch
          %466 = sbr.rel (%p464) target = $region44
        $region43: #{tpu_custom_call.1} parent=11 // pred_region
          _
        $region44: #{tpu_custom_call.1} parent=11 // pred_fallthru
          _
        // Predicated region
        $region45: #{tpu_custom_call.1} parent=11 // pred_check
          %p467 = pneg %p341
        $region46: #{tpu_custom_call.1} parent=11 // pred_check_branch
          %469 = sbr.rel (%p467) target = $region48
        $region47: #{tpu_custom_call.1} parent=11 // pred_region
          _
        $region48: #{tpu_custom_call.1} parent=11 // pred_fallthru
          _
        // Predicated region
        $region49: #{tpu_custom_call.1} parent=11 // pred_check
          %p470 = pneg %p362
        $region50: #{tpu_custom_call.1} parent=11 // pred_check_branch
          %472 = sbr.rel (%p470) target = $region52
        $region51: #{tpu_custom_call.1} parent=11 // pred_region
          _
        $region52: #{tpu_custom_call.1} parent=11 // pred_fallthru
          _
      $region12: #{tpu_custom_call.1} parent=5 // pred_fallthru
        _
      %p473 = scmp.lt.s32.totalorder %s26, 4
      // Predicated region
      $region53: #{tpu_custom_call.1} parent=5 // pred_check
        %p474 = pneg %p473
      $region54: #{tpu_custom_call.1} parent=5 // pred_check_branch
        %476 = sbr.rel (%p474) target = $region56
      $region55: #{tpu_custom_call.1} parent=5 // pred_region
        // Predicated region
        $region57: #{tpu_custom_call.1} parent=55 // pred_check
          %p477 = pneg %p110
        $region58: #{tpu_custom_call.1} parent=55 // pred_check_branch
          %479 = sbr.rel (%p477) target = $region60
        $region59: #{tpu_custom_call.1} parent=55 // pred_region
          %p480 = scmp.lt.s32.totalorder %s34, 3
          %s481 = scalar_select %p480, %s34, 3
          %s482 = smul.addr %s481, 4
          %s483 = smul.addr %s482, 4
          %s484 = scalar_lea.vmem %s2, %s483
        $region60: #{tpu_custom_call.1} parent=55 // pred_fallthru
          _
        // Predicated region
        $region61: #{tpu_custom_call.1} parent=55 // pred_check
          %p485 = pneg %p136
        $region62: #{tpu_custom_call.1} parent=55 // pred_check_branch
          %487 = sbr.rel (%p485) target = $region64
        $region63: #{tpu_custom_call.1} parent=55 // pred_region
          %p488 = scmp.lt.s32.totalorder %s34, 3
          %s489 = scalar_select %p488, %s34, 3
          %s490 = smul.addr %s489, 4
          %s491 = smul.addr %s490, 4
          %s492 = scalar_lea.vmem %s3, %s491
        $region64: #{tpu_custom_call.1} parent=55 // pred_fallthru
          _
        // Predicated region
        $region65: #{tpu_custom_call.1} parent=55 // pred_check
          %p493 = pneg %p162
        $region66: #{tpu_custom_call.1} parent=55 // pred_check_branch
          %495 = sbr.rel (%p493) target = $region68
        $region67: #{tpu_custom_call.1} parent=55 // pred_region
          %p496 = scmp.lt.s32.totalorder %s34, 3
          %s497 = scalar_select %p496, %s34, 3
          %s498 = smul.addr %s497, 4
          %s499 = smul.addr %s498, 4
          %s500 = scalar_lea.vmem %s4, %s499
        $region68: #{tpu_custom_call.1} parent=55 // pred_fallthru
          _
        // Predicated region
        $region69: #{tpu_custom_call.1} parent=55 // pred_check
          %p501 = pneg %p188
        $region70: #{tpu_custom_call.1} parent=55 // pred_check_branch
          %503 = sbr.rel (%p501) target = $region72
        $region71: #{tpu_custom_call.1} parent=55 // pred_region
          %p504 = scmp.lt.s32.totalorder %s34, 3
          %s505 = scalar_select %p504, %s34, 3
          %s506 = smul.addr %s505, 4
          %s507 = scalar_lea.vmem %s5, %s506
        $region72: #{tpu_custom_call.1} parent=55 // pred_fallthru
          _
      $region56: #{tpu_custom_call.1} parent=5 // pred_fallthru
        _
      %p508 = scmp.le.s32.totalorder 1, %s26
      %p509 = scmp.lt.s32.totalorder %s26, 5
      %p510 = pnand %p508, %p509
      %p511 = pneg %p510
      // Predicated region
      $region73: #{tpu_custom_call.1} parent=5 // pred_check
        _
      $region74: #{tpu_custom_call.1} parent=5 // pred_check_branch
        %513 = sbr.rel (%p510) target = $region76
      $region75: #{tpu_custom_call.1} parent=5 // pred_region
        %s514 = ssub.s32 %s26, 1
        %s515 = smul.u32 2, %s35
        %p516 = scmp.lt.s32.totalorder %s515, 1
        %s517 = scalar_select %p516, %s515, 1
        %s518 = smul.addr %s517, 8
        %s519 = scalar_lea.vmem %s0, %s518
        %p520 = pneg %p64
        %p521 = pneg %p61
        %s522 = smul.u32 2, %s35
        %p523 = scmp.lt.s32.totalorder %s522, 1
        %s524 = scalar_select %p523, %s522, 1
        %s525 = smul.addr %s524, 8
        %s526 = scalar_lea.vmem %s1, %s525
        %p527 = pneg %p90
        %p528 = pneg %p87
        %p529 = scmp.lt.s32.totalorder %s36, 3
        %s530 = scalar_select %p529, %s36, 3
        %s531 = smul.addr %s530, 4
        %s532 = smul.addr %s531, 4
        %s533 = scalar_lea.vmem %s2, %s532
        %p534 = pneg %p116
        %p535 = pneg %p113
        %p536 = scmp.lt.s32.totalorder %s36, 3
        %s537 = scalar_select %p536, %s36, 3
        %s538 = smul.addr %s537, 4
        %s539 = smul.addr %s538, 4
        %s540 = scalar_lea.vmem %s3, %s539
        %p541 = pneg %p142
        %p542 = pneg %p139
        %p543 = scmp.lt.s32.totalorder %s36, 3
        %s544 = scalar_select %p543, %s36, 3
        %s545 = smul.addr %s544, 4
        %s546 = smul.addr %s545, 4
        %s547 = scalar_lea.vmem %s4, %s546
        %p548 = pneg %p168
        %p549 = pneg %p165
        %p550 = scmp.lt.s32.totalorder %s36, 3
        %s551 = scalar_select %p550, %s36, 3
        %s552 = smul.addr %s551, 4
        %s553 = scalar_lea.vmem %s5, %s552
        %p554 = pneg %p194
        %p555 = pneg %p191
        %p556 = pneg %p215
        %p557 = pneg %p212
        %p558 = pneg %p236
        %p559 = pneg %p233
        %p560 = pneg %p257
        %p561 = pneg %p254
        %p562 = pneg %p278
        %p563 = pneg %p275
        %p564 = pneg %p299
        %p565 = pneg %p296
        %p566 = pneg %p320
        %p567 = pneg %p317
        %p568 = pneg %p341
        %p569 = pneg %p338
        %p570 = pneg %p362
        %p571 = pneg %p359
        %p572 = pneg %p388
        %p573 = pneg %p385
        %p574 = pneg %p416
        %p575 = pneg %p413
        %s576 = sand.u32 %s403, 1
        %s577 = scalar_lea.sflag [#allocation6], %s576
        %s578 = sand.u32 %s403, 1
        %s579 = smul.addr %s578, 16
        %s580 = scalar_lea.vmem [#allocation5], %s579
        %s581 = smul.u32 2, %s35
        %p582 = scmp.lt.s32.totalorder %s581, 1
        %s583 = scalar_select %p582, %s581, 1
        %s584 = smul.addr %s583, 8
        %s585 = scalar_lea.vmem %s0, %s584
        %s586 = smul.u32 2, %s35
        %s587 = smul.u32 2, %s35
        %p588 = scmp.lt.s32.totalorder %s587, 1
        %s589 = scalar_select %p588, %s587, 1
        %s590 = smul.addr %s589, 8
        %s591 = scalar_lea.vmem %s1, %s590
        %s592 = smul.u32 2, %s35
        %p593 = scmp.lt.s32.totalorder %s36, 3
        %s594 = scalar_select %p593, %s36, 3
        %s595 = smul.addr %s594, 4
        %s596 = smul.addr %s595, 4
        %s597 = scalar_lea.vmem %s2, %s596
        %p598 = scmp.lt.s32.totalorder %s36, 3
        %s599 = scalar_select %p598, %s36, 3
        %s600 = smul.addr %s599, 4
        %s601 = smul.addr %s600, 4
        %s602 = scalar_lea.vmem %s3, %s601
        %p603 = scmp.lt.s32.totalorder %s36, 3
        %s604 = scalar_select %p603, %s36, 3
        %s605 = smul.addr %s604, 4
        %s606 = smul.addr %s605, 4
        %s607 = scalar_lea.vmem %s4, %s606
        %p608 = scmp.lt.s32.totalorder %s36, 3
        %s609 = scalar_select %p608, %s36, 3
        %s610 = smul.addr %s609, 4
        %s611 = scalar_lea.vmem %s5, %s610
        %s612 = smul.u32 2, %s35
        %s613 = smul.u32 2, %s35
        %p615 = scmp.eq.s32.totalorder %s36, 0
        // Predicated region
        $region77: #{tpu_custom_call.1} parent=75 // pred_check
          %p616 = pneg %p615
        $region78: #{tpu_custom_call.1} parent=75 // pred_check_branch
          %618 = sbr.rel (%p616) target = $region80
        $region79: #{tpu_custom_call.1} parent=75 // pred_region
          %vm619 = vcmask 261120
          %620 = vst.msk [vmem:[#allocation2] sm:$0xff] %vm619, 0.0
          %621 = vst.msk [vmem:[#allocation2 + $0x8] sm:$0xff] %vm619, 0.0
        $region80: #{tpu_custom_call.1} parent=75 // pred_fallthru
          _
        %v622 = vld [vmem:[%s585] sm:$0xff]
        %v623 = vld [vmem:[%s585 + $0x8] sm:$0xff]
        %v624 = vpack.c.bf16 %v623, %v622
        %v625 = vld [vmem:[%s597] sm:$0xf]
        %v626 = vld [vmem:[%s597 + $0x4] sm:$0xf]
        %v627 = vld [vmem:[%s597 + $0x8] sm:$0xf]
        %v628 = vld [vmem:[%s597 + $0xc] sm:$0xf]
        %v633 = vunpack.c.l.b16 %v625
        %v634 = vunpack.c.l.b16 %v626
        %v635 = vunpack.c.l.b16 %v627
        %v636 = vunpack.c.l.b16 %v628
        %v637 = vpack.c.b16 %v634, %v633
        %v638 = vpack.c.b16 %v636, %v635
        %vm641 = vcmask 261120
        %v643 = vsel %vm641, %v624, 0
        %645 = vmatprep.subr.bf16.mxu0 0
        %646 = vmatpush1.bf16.msra.mxu0 0
        %647 = vmatprep.subr.bf16.mxu0 0
        %648 = vmatpush1.bf16.msra.mxu0 0
        %649 = vmatprep.subr.bf16.mxu0 0
        %650 = vmatpush1.bf16.msra.mxu0 0
        %651 = vmatprep.subr.bf16.mxu0 0
        %652 = vmatpush1.bf16.msra.mxu0 0
        %653 = vmatprep.subr.bf16.mxu0 0
        %654 = vmatpush1.bf16.msra.mxu0 0
        %655 = vmatprep.subr.bf16.mxu0 0
        %656 = vmatpush1.bf16.msra.mxu0 0
        %657 = vmatprep.subr.bf16.mxu0 0
        %658 = vmatpush1.bf16.msra.mxu0 %v638
        %659 = vmatprep.subr.bf16.mxu0 0
        %660 = vmatpush1.bf16.msra.mxu0 %v637
        %661 = vmatprep.subr.bf16.mxu0 0
        %662 = vmatpush2.bf16.msra.mxu0 0
        %663 = vmatprep.subr.bf16.mxu0 0
        %664 = vmatpush2.bf16.msra.mxu0 0
        %665 = vmatprep.subr.bf16.mxu0 0
        %666 = vmatpush2.bf16.msra.mxu0 0
        %667 = vmatprep.subr.bf16.mxu0 0
        %668 = vmatpush2.bf16.msra.mxu0 0
        %669 = vmatprep.subr.bf16.mxu0 0
        %670 = vmatpush2.bf16.msra.mxu0 0
        %671 = vmatprep.subr.bf16.mxu0 0
        %672 = vmatpush2.bf16.msra.mxu0 0
        %673 = vmatprep.subr.bf16.mxu0 0
        %674 = vmatpush2.bf16.msra.mxu0 0
        %675 = vmatprep.subr.bf16.mxu0 0
        %676 = vmatpush2.bf16.msra.mxu0 0
        %677 = vmatprep.mubr.bf16.mxu0 0
        %678 = vmatmul.mubr.bf16.gmra.mxu0 %v643
        %v679 = vpop.f32.mrf.mxu0
        %v680 = vadd.f32 0.0, %v679
        %v681 = vpop.f32.mrf.mxu0
        %v682 = vpop.f32.mrf.mxu0
        %v683 = vadd.f32 0.0, %v682
        %v684 = vpop.f32.mrf.mxu0
        %685 = vdwg.mxu0
        %v686 = vld [vmem:[%s602] sm:$0xf]
        %v687 = vld [vmem:[%s602 + $0x4] sm:$0xf]
        %v688 = vld [vmem:[%s602 + $0x8] sm:$0xf]
        %v689 = vld [vmem:[%s602 + $0xc] sm:$0xf]
        %v694 = vunpack.c.l.b16 %v686
        %v695 = vunpack.c.l.b16 %v687
        %v696 = vunpack.c.l.b16 %v688
        %v697 = vunpack.c.l.b16 %v689
        %v698 = vpack.c.b16 %v695, %v694
        %v699 = vpack.c.b16 %v697, %v696
        %702 = vmatprep.subr.bf16.mxu0 0
        %703 = vmatpush1.bf16.msra.mxu0 0
        %704 = vmatprep.subr.bf16.mxu0 0
        %705 = vmatpush1.bf16.msra.mxu0 0
        %706 = vmatprep.subr.bf16.mxu0 0
        %707 = vmatpush1.bf16.msra.mxu0 0
        %708 = vmatprep.subr.bf16.mxu0 0
        %709 = vmatpush1.bf16.msra.mxu0 0
        %710 = vmatprep.subr.bf16.mxu0 0
        %711 = vmatpush1.bf16.msra.mxu0 0
        %712 = vmatprep.subr.bf16.mxu0 0
        %713 = vmatpush1.bf16.msra.mxu0 0
        %714 = vmatprep.subr.bf16.mxu0 0
        %715 = vmatpush1.bf16.msra.mxu0 %v699
        %716 = vmatprep.subr.bf16.mxu0 0
        %717 = vmatpush1.bf16.msra.mxu0 %v698
        %718 = vmatprep.subr.bf16.mxu0 0
        %719 = vmatpush2.bf16.msra.mxu0 0
        %720 = vmatprep.subr.bf16.mxu0 0
        %721 = vmatpush2.bf16.msra.mxu0 0
        %722 = vmatprep.subr.bf16.mxu0 0
        %723 = vmatpush2.bf16.msra.mxu0 0
        %724 = vmatprep.subr.bf16.mxu0 0
        %725 = vmatpush2.bf16.msra.mxu0 0
        %726 = vmatprep.subr.bf16.mxu0 0
        %727 = vmatpush2.bf16.msra.mxu0 0
        %728 = vmatprep.subr.bf16.mxu0 0
        %729 = vmatpush2.bf16.msra.mxu0 0
        %730 = vmatprep.subr.bf16.mxu0 0
        %731 = vmatpush2.bf16.msra.mxu0 0
        %732 = vmatprep.subr.bf16.mxu0 0
        %733 = vmatpush2.bf16.msra.mxu0 0
        %734 = vmatprep.mubr.bf16.mxu0 0
        %735 = vmatmul.mubr.bf16.gmra.mxu0 %v643
        %v736 = vpop.f32.mrf.mxu0
        %v737 = vadd.f32 0.0, %v736
        %v738 = vpop.f32.mrf.mxu0
        %v739 = vpop.f32.mrf.mxu0
        %v740 = vadd.f32 0.0, %v739
        %v741 = vpop.f32.mrf.mxu0
        %742 = vdwg.mxu0
        %v743 = vld [vmem:[%s607] sm:$0xf]
        %v744 = vld [vmem:[%s607 + $0x4] sm:$0xf]
        %v745 = vld [vmem:[%s607 + $0x8] sm:$0xf]
        %v746 = vld [vmem:[%s607 + $0xc] sm:$0xf]
        %v751 = vunpack.c.l.b16 %v743
        %v752 = vunpack.c.l.b16 %v744
        %v753 = vunpack.c.l.b16 %v745
        %v754 = vunpack.c.l.b16 %v746
        %v755 = vpack.c.b16 %v752, %v751
        %v756 = vpack.c.b16 %v754, %v753
        %759 = vmatprep.subr.bf16.mxu0 0
        %760 = vmatpush1.bf16.msra.mxu0 0
        %761 = vmatprep.subr.bf16.mxu0 0
        %762 = vmatpush1.bf16.msra.mxu0 0
        %763 = vmatprep.subr.bf16.mxu0 0
        %764 = vmatpush1.bf16.msra.mxu0 0
        %765 = vmatprep.subr.bf16.mxu0 0
        %766 = vmatpush1.bf16.msra.mxu0 0
        %767 = vmatprep.subr.bf16.mxu0 0
        %768 = vmatpush1.bf16.msra.mxu0 0
        %769 = vmatprep.subr.bf16.mxu0 0
        %770 = vmatpush1.bf16.msra.mxu0 0
        %771 = vmatprep.subr.bf16.mxu0 0
        %772 = vmatpush1.bf16.msra.mxu0 %v756
        %773 = vmatprep.subr.bf16.mxu0 0
        %774 = vmatpush1.bf16.msra.mxu0 %v755
        %775 = vmatprep.subr.bf16.mxu0 0
        %776 = vmatpush2.bf16.msra.mxu0 0
        %777 = vmatprep.subr.bf16.mxu0 0
        %778 = vmatpush2.bf16.msra.mxu0 0
        %779 = vmatprep.subr.bf16.mxu0 0
        %780 = vmatpush2.bf16.msra.mxu0 0
        %781 = vmatprep.subr.bf16.mxu0 0
        %782 = vmatpush2.bf16.msra.mxu0 0
        %783 = vmatprep.subr.bf16.mxu0 0
        %784 = vmatpush2.bf16.msra.mxu0 0
        %785 = vmatprep.subr.bf16.mxu0 0
        %786 = vmatpush2.bf16.msra.mxu0 0
        %787 = vmatprep.subr.bf16.mxu0 0
        %788 = vmatpush2.bf16.msra.mxu0 0
        %789 = vmatprep.subr.bf16.mxu0 0
        %790 = vmatpush2.bf16.msra.mxu0 0
        %791 = vmatprep.mubr.bf16.mxu0 0
        %792 = vmatmul.mubr.bf16.gmra.mxu0 %v643
        %v793 = vpop.f32.mrf.mxu0
        %v794 = vadd.f32 0.0, %v793
        %v795 = vpop.f32.mrf.mxu0
        %v796 = vpop.f32.mrf.mxu0
        %v797 = vadd.f32 0.0, %v796
        %v798 = vpop.f32.mrf.mxu0
        %799 = vdwg.mxu0
        %v800 = vpack.c.bf16 %v680, %v680
        %v801 = vpack.c.bf16 %v683, %v683
        %v802 = vpack.c.bf16 %v737, %v737
        %v803 = vpack.c.bf16 %v740, %v740
        %v804 = vpack.c.bf16 %v794, %v794
        %v805 = vpack.c.bf16 %v797, %v797
        %vm806 = vcmask 64512
        %v808 = vsel %vm806, %v800, 0
        %v811 = vsel %vm806, %v802, 0
        %813 = vmatprep.subr.bf16.mxu0 0
        %814 = vmatpush1.bf16.xpose.msra.mxu0 0
        %815 = vmatprep.subr.bf16.mxu0 0
        %816 = vmatpush1.bf16.xpose.msra.mxu0 0
        %817 = vmatprep.subr.bf16.mxu0 0
        %818 = vmatpush1.bf16.xpose.msra.mxu0 0
        %819 = vmatprep.subr.bf16.mxu0 0
        %820 = vmatpush1.bf16.xpose.msra.mxu0 0
        %821 = vmatprep.subr.bf16.mxu0 0
        %822 = vmatpush1.bf16.xpose.msra.mxu0 0
        %823 = vmatprep.subr.bf16.mxu0 0
        %824 = vmatpush1.bf16.xpose.msra.mxu0 0
        %825 = vmatprep.subr.bf16.mxu0 0
        %826 = vmatpush1.bf16.xpose.msra.mxu0 0
        %827 = vmatprep.subr.bf16.mxu0 0
        %828 = vmatpush1.bf16.xpose.msra.mxu0 %v811
        %829 = vmatprep.subr.bf16.mxu0 0
        %830 = vmatpush2.bf16.xpose.msra.mxu0 0
        %831 = vmatprep.subr.bf16.mxu0 0
        %832 = vmatpush2.bf16.xpose.msra.mxu0 0
        %833 = vmatprep.subr.bf16.mxu0 0
        %834 = vmatpush2.bf16.xpose.msra.mxu0 0
        %835 = vmatprep.subr.bf16.mxu0 0
        %836 = vmatpush2.bf16.xpose.msra.mxu0 0
        %837 = vmatprep.subr.bf16.mxu0 0
        %838 = vmatpush2.bf16.xpose.msra.mxu0 0
        %839 = vmatprep.subr.bf16.mxu0 0
        %840 = vmatpush2.bf16.xpose.msra.mxu0 0
        %841 = vmatprep.subr.bf16.mxu0 0
        %842 = vmatpush2.bf16.xpose.msra.mxu0 0
        %843 = vmatprep.subr.bf16.mxu0 0
        %844 = vmatpush2.bf16.xpose.msra.mxu0 0
        %845 = vmatprep.mubr.bf16.mxu0 0
        %846 = vmatmul.mubr.bf16.gmra.mxu0 %v808
        %v847 = vpop.f32.mrf.mxu0
        %v848 = vadd.f32 0.0, %v847
        %v849 = vpop.f32.mrf.mxu0
        %v850 = vpop.f32.mrf.mxu0
        %v851 = vpop.f32.mrf.mxu0
        %852 = vdwg.mxu0
        %v854 = vsel %vm806, %v801, 0
        %v857 = vsel %vm806, %v803, 0
        %859 = vmatprep.subr.bf16.mxu0 0
        %860 = vmatpush1.bf16.xpose.msra.mxu0 0
        %861 = vmatprep.subr.bf16.mxu0 0
        %862 = vmatpush1.bf16.xpose.msra.mxu0 0
        %863 = vmatprep.subr.bf16.mxu0 0
        %864 = vmatpush1.bf16.xpose.msra.mxu0 0
        %865 = vmatprep.subr.bf16.mxu0 0
        %866 = vmatpush1.bf16.xpose.msra.mxu0 0
        %867 = vmatprep.subr.bf16.mxu0 0
        %868 = vmatpush1.bf16.xpose.msra.mxu0 0
        %869 = vmatprep.subr.bf16.mxu0 0
        %870 = vmatpush1.bf16.xpose.msra.mxu0 0
        %871 = vmatprep.subr.bf16.mxu0 0
        %872 = vmatpush1.bf16.xpose.msra.mxu0 0
        %873 = vmatprep.subr.bf16.mxu0 0
        %874 = vmatpush1.bf16.xpose.msra.mxu0 %v857
        %875 = vmatprep.subr.bf16.mxu0 0
        %876 = vmatpush2.bf16.xpose.msra.mxu0 0
        %877 = vmatprep.subr.bf16.mxu0 0
        %878 = vmatpush2.bf16.xpose.msra.mxu0 0
        %879 = vmatprep.subr.bf16.mxu0 0
        %880 = vmatpush2.bf16.xpose.msra.mxu0 0
        %881 = vmatprep.subr.bf16.mxu0 0
        %882 = vmatpush2.bf16.xpose.msra.mxu0 0
        %883 = vmatprep.subr.bf16.mxu0 0
        %884 = vmatpush2.bf16.xpose.msra.mxu0 0
        %885 = vmatprep.subr.bf16.mxu0 0
        %886 = vmatpush2.bf16.xpose.msra.mxu0 0
        %887 = vmatprep.subr.bf16.mxu0 0
        %888 = vmatpush2.bf16.xpose.msra.mxu0 0
        %889 = vmatprep.subr.bf16.mxu0 0
        %890 = vmatpush2.bf16.xpose.msra.mxu0 0
        %891 = vmatprep.mubr.bf16.mxu0 0
        %892 = vmatmul.mubr.bf16.gmra.mxu0 %v854
        %v893 = vpop.f32.mrf.mxu0
        %v894 = vadd.f32 0.0, %v893
        %v895 = vpop.f32.mrf.mxu0
        %v896 = vpop.f32.mrf.mxu0
        %v897 = vpop.f32.mrf.mxu0
        %898 = vdwg.mxu0
        %v899 = vmul.f32 %v848, 0.35355338
        %v900 = vmul.f32 %v894, 0.35355338
        %v901 = vld [vmem:[%s591] sm:$0xff]
        %v902 = vld [vmem:[%s591 + $0x8] sm:$0xff]
        %vm903 = vcmp.gt.f32.partialorder %v901, 0.5
        %vm904 = vcmp.gt.f32.partialorder %v902, 0.5
        %v905 = vsel %vm903, -1e+09, %v899
        %v906 = vsel %vm904, -1e+09, %v900
        %v907 = vsel %vm806, %v905, -inf
        %908 = vmax.xlane.f32.xlu0 %v907
        %v909 = vpop.xlane.xlu0 %908
        %v910 = vsel %vm806, %v906, -inf
        %911 = vmax.xlane.f32.xlu0 %v910
        %v912 = vpop.xlane.xlu0 %911
        %v913 = vsub.f32 %v905, %v909
        %v914 = vsub.f32 %v906, %v912
        %v915 = vmul.f32 %v913, 1.442695
        %v916 = vpow.pop %v915
        %v917 = vmul.f32 %v914, 1.442695
        %v918 = vpow.pop %v917
        %v919 = vsel %vm806, %v916, 0.0
        %920 = vadd.xlane.f32.xlu0 %v919
        %v921 = vpop.xlane.xlu0 %920
        %v922 = vsel %vm806, %v918, 0.0
        %923 = vadd.xlane.f32.xlu0 %v922
        %v924 = vpop.xlane.xlu0 %923
        %v925 = vrcp.pop %v921
        %v926 = vrcp.pop %v924
        %v927 = vmul.f32 %v916, %v925
        %v928 = vmul.f32 %v918, %v926
        %929 = vst.msk [vmem:[%s580] sm:$0xff] %vm806, %v927
        %930 = vst.msk [vmem:[%s580 + $0x8] sm:$0xff] %vm806, %v928
        %v931 = vpack.c.bf16 %v927, %v927
        %v932 = vpack.c.bf16 %v928, %v928
        %v934 = vsel %vm806, %v931, 0
        %vm936 = vcmask 1043456
        %v938 = vsel %vm936, %v804, 0
        %940 = vmatprep.subr.bf16.mxu0 0
        %941 = vmatpush1.bf16.msra.mxu0 0
        %942 = vmatprep.subr.bf16.mxu0 0
        %943 = vmatpush1.bf16.msra.mxu0 0
        %944 = vmatprep.subr.bf16.mxu0 0
        %945 = vmatpush1.bf16.msra.mxu0 0
        %946 = vmatprep.subr.bf16.mxu0 0
        %947 = vmatpush1.bf16.msra.mxu0 0
        %948 = vmatprep.subr.bf16.mxu0 0
        %949 = vmatpush1.bf16.msra.mxu0 0
        %950 = vmatprep.subr.bf16.mxu0 0
        %951 = vmatpush1.bf16.msra.mxu0 0
        %952 = vmatprep.subr.bf16.mxu0 0
        %953 = vmatpush1.bf16.msra.mxu0 0
        %954 = vmatprep.subr.bf16.mxu0 0
        %955 = vmatpush1.bf16.msra.mxu0 %v938
        %956 = vmatprep.subr.bf16.mxu0 0
        %957 = vmatpush2.bf16.msra.mxu0 0
        %958 = vmatprep.subr.bf16.mxu0 0
        %959 = vmatpush2.bf16.msra.mxu0 0
        %960 = vmatprep.subr.bf16.mxu0 0
        %961 = vmatpush2.bf16.msra.mxu0 0
        %962 = vmatprep.subr.bf16.mxu0 0
        %963 = vmatpush2.bf16.msra.mxu0 0
        %964 = vmatprep.subr.bf16.mxu0 0
        %965 = vmatpush2.bf16.msra.mxu0 0
        %966 = vmatprep.subr.bf16.mxu0 0
        %967 = vmatpush2.bf16.msra.mxu0 0
        %968 = vmatprep.subr.bf16.mxu0 0
        %969 = vmatpush2.bf16.msra.mxu0 0
        %970 = vmatprep.subr.bf16.mxu0 0
        %971 = vmatpush2.bf16.msra.mxu0 0
        %972 = vmatprep.mubr.bf16.mxu0 0
        %973 = vmatmul.mubr.bf16.gmra.mxu0 %v934
        %v974 = vpop.f32.mrf.mxu0
        %v975 = vadd.f32 0.0, %v974
        %v976 = vpop.f32.mrf.mxu0
        %v977 = vpop.f32.mrf.mxu0
        %v978 = vpop.f32.mrf.mxu0
        %979 = vdwg.mxu0
        %v981 = vsel %vm806, %v932, 0
        %v984 = vsel %vm936, %v805, 0
        %986 = vmatprep.subr.bf16.mxu0 0
        %987 = vmatpush1.bf16.msra.mxu0 0
        %988 = vmatprep.subr.bf16.mxu0 0
        %989 = vmatpush1.bf16.msra.mxu0 0
        %990 = vmatprep.subr.bf16.mxu0 0
        %991 = vmatpush1.bf16.msra.mxu0 0
        %992 = vmatprep.subr.bf16.mxu0 0
        %993 = vmatpush1.bf16.msra.mxu0 0
        %994 = vmatprep.subr.bf16.mxu0 0
        %995 = vmatpush1.bf16.msra.mxu0 0
        %996 = vmatprep.subr.bf16.mxu0 0
        %997 = vmatpush1.bf16.msra.mxu0 0
        %998 = vmatprep.subr.bf16.mxu0 0
        %999 = vmatpush1.bf16.msra.mxu0 0
        %1000 = vmatprep.subr.bf16.mxu0 0
        %1001 = vmatpush1.bf16.msra.mxu0 %v984
        %1002 = vmatprep.subr.bf16.mxu0 0
        %1003 = vmatpush2.bf16.msra.mxu0 0
        %1004 = vmatprep.subr.bf16.mxu0 0
        %1005 = vmatpush2.bf16.msra.mxu0 0
        %1006 = vmatprep.subr.bf16.mxu0 0
        %1007 = vmatpush2.bf16.msra.mxu0 0
        %1008 = vmatprep.subr.bf16.mxu0 0
        %1009 = vmatpush2.bf16.msra.mxu0 0
        %1010 = vmatprep.subr.bf16.mxu0 0
        %1011 = vmatpush2.bf16.msra.mxu0 0
        %1012 = vmatprep.subr.bf16.mxu0 0
        %1013 = vmatpush2.bf16.msra.mxu0 0
        %1014 = vmatprep.subr.bf16.mxu0 0
        %1015 = vmatpush2.bf16.msra.mxu0 0
        %1016 = vmatprep.subr.bf16.mxu0 0
        %1017 = vmatpush2.bf16.msra.mxu0 0
        %1018 = vmatprep.mubr.bf16.mxu0 0
        %1019 = vmatmul.mubr.bf16.gmra.mxu0 %v981
        %v1020 = vpop.f32.mrf.mxu0
        %v1021 = vadd.f32 0.0, %v1020
        %v1022 = vpop.f32.mrf.mxu0
        %v1023 = vpop.f32.mrf.mxu0
        %v1024 = vpop.f32.mrf.mxu0
        %1025 = vdwg.mxu0
        %v1026 = vpack.c.bf16 %v1021, %v975
        %v1027 = vld [vmem:[#allocation2] sm:$0xff]
        %v1028 = vld [vmem:[#allocation2 + $0x8] sm:$0xff]
        %v1029 = vld [vmem:[%s611] sm:$0xf]
        %v1031 = vsel %vm806, %v1026, 0
        %v1034 = vsel %vm936, %v1029, 0
        %1036 = vmatprep.subr.bf16.mxu0 0
        %1037 = vmatpush1.bf16.msra.mxu0 0
        %1038 = vmatprep.subr.bf16.mxu0 0
        %1039 = vmatpush1.bf16.msra.mxu0 0
        %1040 = vmatprep.subr.bf16.mxu0 0
        %1041 = vmatpush1.bf16.msra.mxu0 0
        %1042 = vmatprep.subr.bf16.mxu0 0
        %1043 = vmatpush1.bf16.msra.mxu0 0
        %1044 = vmatprep.subr.bf16.mxu0 0
        %1045 = vmatpush1.bf16.msra.mxu0 0
        %1046 = vmatprep.subr.bf16.mxu0 0
        %1047 = vmatpush1.bf16.msra.mxu0 0
        %1048 = vmatprep.subr.bf16.mxu0 0
        %1049 = vmatpush1.bf16.msra.mxu0 0
        %1050 = vmatprep.subr.bf16.mxu0 0
        %1051 = vmatpush1.bf16.msra.mxu0 %v1034
        %1052 = vmatprep.subr.bf16.mxu0 0
        %1053 = vmatpush2.bf16.msra.mxu0 0
        %1054 = vmatprep.subr.bf16.mxu0 0
        %1055 = vmatpush2.bf16.msra.mxu0 0
        %1056 = vmatprep.subr.bf16.mxu0 0
        %1057 = vmatpush2.bf16.msra.mxu0 0
        %1058 = vmatprep.subr.bf16.mxu0 0
        %1059 = vmatpush2.bf16.msra.mxu0 0
        %1060 = vmatprep.subr.bf16.mxu0 0
        %1061 = vmatpush2.bf16.msra.mxu0 0
        %1062 = vmatprep.subr.bf16.mxu0 0
        %1063 = vmatpush2.bf16.msra.mxu0 0
        %1064 = vmatprep.subr.bf16.mxu0 0
        %1065 = vmatpush2.bf16.msra.mxu0 0
        %1066 = vmatprep.subr.bf16.mxu0 0
        %1067 = vmatpush2.bf16.msra.mxu0 0
        %1068 = vmatprep.mubr.bf16.mxu0 0
        %1069 = vmatmul.mubr.bf16.gmra.mxu0 %v1031
        %v1070 = vpop.f32.mrf.mxu0
        %v1071 = vadd.f32 0.0, %v1070
        %v1072 = vpop.f32.mrf.mxu0
        %v1073 = vpop.f32.mrf.mxu0
        %v1074 = vadd.f32 0.0, %v1073
        %v1075 = vpop.f32.mrf.mxu0
        %1076 = vdwg.mxu0
        %v1077 = vadd.f32 %v1027, %v1071
        %v1078 = vadd.f32 %v1028, %v1074
        %1079 = vst.msk [vmem:[#allocation2] sm:$0xff] %vm641, %v1077
        %1080 = vst.msk [vmem:[#allocation2 + $0x8] sm:$0xff] %vm641, %v1078
        %p1081 = scmp.eq.s32.totalorder %s36, 3
        // Predicated region
        $region81: #{tpu_custom_call.1} parent=75 // pred_check
          %p1082 = pneg %p1081
        $region82: #{tpu_custom_call.1} parent=75 // pred_check_branch
          %1084 = sbr.rel (%p1082) target = $region84
        $region83: #{tpu_custom_call.1} parent=75 // pred_region
          %v1085 = vld [vmem:[#allocation2] sm:$0xff]
          %v1086 = vld [vmem:[#allocation2 + $0x8] sm:$0xff]
          %v1087 = vadd.f32 %v1085, %v622
          %v1088 = vadd.f32 %v1086, %v623
          %v1089 = vld [vmem:[%s6] sm:$0x1]
          %v1090 = vld [vmem:[%s7] sm:$0x1]
          %v1091 = vsel %vm641, %v1087, 0.0
          %1092 = vadd.xlane.f32.xlu0 %v1091
          %v1093 = vpop.xlane.xlu0 %1092
          %v1094 = vsel %vm641, %v1088, 0.0
          %1095 = vadd.xlane.f32.xlu0 %v1094
          %v1096 = vpop.xlane.xlu0 %1095
          %v1097 = vrcp.pop 32.0
          %v1098 = vmul.f32 %v1093, %v1097
          %v1099 = vmul.f32 %v1096, %v1097
          %v1100 = vsub.f32 %v1087, %v1098
          %v1101 = vsub.f32 %v1088, %v1099
          %v1102 = vmul.f32 %v1100, %v1100
          %v1103 = vmul.f32 %v1101, %v1101
          %v1104 = vsel %vm641, %v1102, 0.0
          %1105 = vadd.xlane.f32.xlu0 %v1104
          %v1106 = vpop.xlane.xlu0 %1105
          %v1107 = vsel %vm641, %v1103, 0.0
          %1108 = vadd.xlane.f32.xlu0 %v1107
          %v1109 = vpop.xlane.xlu0 %1108
          %v1110 = vmul.f32 %v1106, %v1097
          %v1111 = vmul.f32 %v1109, %v1097
          %v1112 = vadd.f32 %v1110, 1e-05
          %v1113 = vadd.f32 %v1111, 1e-05
          %v1114 = vrsqrt.pop %v1112
          %v1115 = vrsqrt.pop %v1113
          %v1116 = vmul.f32 %v1100, %v1114
          %v1117 = vmul.f32 %v1101, %v1115
          %v1119 = vlaneseq
          %v1120 = vshrl.u32 %v1119, 7
          %v1121 = vsub.s32 0, %v1120
          %v1122 = vrot.slane %v1089, %v1121
          %v1124 = vmul.f32 %v1116, %v1122
          %v1125 = vmul.f32 %v1117, %v1122
          %v1127 = vlaneseq
          %v1128 = vshrl.u32 %v1127, 7
          %v1129 = vsub.s32 0, %v1128
          %v1130 = vrot.slane %v1090, %v1129
          %v1132 = vadd.f32 %v1124, %v1130
          %v1133 = vadd.f32 %v1125, %v1130
          %v1134 = vpack.c.bf16 %v1133, %v1132
          %v1135 = vld [vmem:[%s8] sm:$0xf]
          %v1136 = vld [vmem:[%s8 + $0x4] sm:$0xf]
          %v1137 = vld [vmem:[%s8 + $0x8] sm:$0xf]
          %v1138 = vld [vmem:[%s8 + $0xc] sm:$0xf]
          %v1139 = vld [vmem:[%s9] sm:$0x1]
          %v1141 = vlaneseq
          %v1142 = vshrl.u32 %v1141, 7
          %v1143 = vsub.s32 0, %v1142
          %v1144 = vrot.slane %v1139, %v1143
          %v1150 = vunpack.c.l.b16 %v1135
          %v1151 = vunpack.c.l.b16 %v1136
          %v1152 = vunpack.c.l.b16 %v1137
          %v1153 = vunpack.c.l.b16 %v1138
          %v1154 = vpack.c.b16 %v1151, %v1150
          %v1155 = vpack.c.b16 %v1153, %v1152
          %v1159 = vsel %vm641, %v1134, 0
          %1161 = vmatprep.subr.bf16.mxu0 0
          %1162 = vmatpush1.bf16.msra.mxu0 0
          %1163 = vmatprep.subr.bf16.mxu0 0
          %1164 = vmatpush1.bf16.msra.mxu0 0
          %1165 = vmatprep.subr.bf16.mxu0 0
          %1166 = vmatpush1.bf16.msra.mxu0 0
          %1167 = vmatprep.subr.bf16.mxu0 0
          %1168 = vmatpush1.bf16.msra.mxu0 0
          %1169 = vmatprep.subr.bf16.mxu0 0
          %1170 = vmatpush1.bf16.msra.mxu0 0
          %1171 = vmatprep.subr.bf16.mxu0 0
          %1172 = vmatpush1.bf16.msra.mxu0 0
          %1173 = vmatprep.subr.bf16.mxu0 0
          %1174 = vmatpush1.bf16.msra.mxu0 %v1155
          %1175 = vmatprep.subr.bf16.mxu0 0
          %1176 = vmatpush1.bf16.msra.mxu0 %v1154
          %1177 = vmatprep.subr.bf16.mxu0 0
          %1178 = vmatpush2.bf16.msra.mxu0 0
          %1179 = vmatprep.subr.bf16.mxu0 0
          %1180 = vmatpush2.bf16.msra.mxu0 0
          %1181 = vmatprep.subr.bf16.mxu0 0
          %1182 = vmatpush2.bf16.msra.mxu0 0
          %1183 = vmatprep.subr.bf16.mxu0 0
          %1184 = vmatpush2.bf16.msra.mxu0 0
          %1185 = vmatprep.subr.bf16.mxu0 0
          %1186 = vmatpush2.bf16.msra.mxu0 0
          %1187 = vmatprep.subr.bf16.mxu0 0
          %1188 = vmatpush2.bf16.msra.mxu0 0
          %1189 = vmatprep.subr.bf16.mxu0 0
          %1190 = vmatpush2.bf16.msra.mxu0 0
          %1191 = vmatprep.subr.bf16.mxu0 0
          %1192 = vmatpush2.bf16.msra.mxu0 0
          %1193 = vmatprep.mubr.bf16.mxu0 0
          %1194 = vmatmul.mubr.bf16.gmra.mxu0 %v1159
          %v1195 = vpop.f32.mrf.mxu0
          %v1196 = vadd.f32 %v1144, %v1195
          %v1197 = vpop.f32.mrf.mxu0
          %v1198 = vpop.f32.mrf.mxu0
          %v1199 = vadd.f32 %v1144, %v1198
          %v1200 = vpop.f32.mrf.mxu0
          %1201 = vdwg.mxu0
          %v1202 = vmax.f32 %v1196, 0.0
          %v1203 = vmax.f32 %v1199, 0.0
          %v1204 = vpack.c.bf16 %v1203, %v1202
          %v1205 = vld [vmem:[%s10] sm:$0xf]
          %v1206 = vld [vmem:[%s10 + $0x4] sm:$0xf]
          %v1207 = vld [vmem:[%s10 + $0x8] sm:$0xf]
          %v1208 = vld [vmem:[%s10 + $0xc] sm:$0xf]
          %v1209 = vld [vmem:[%s10 + $0x10] sm:$0xf]
          %v1210 = vld [vmem:[%s10 + $0x14] sm:$0xf]
          %v1211 = vld [vmem:[%s10 + $0x18] sm:$0xf]
          %v1212 = vld [vmem:[%s10 + $0x1c] sm:$0xf]
          %v1213 = vld [vmem:[%s11] sm:$0x1]
          %v1215 = vlaneseq
          %v1216 = vshrl.u32 %v1215, 7
          %v1217 = vsub.s32 0, %v1216
          %v1218 = vrot.slane %v1213, %v1217
          %v1228 = vunpack.c.l.b16 %v1205
          %v1229 = vunpack.c.l.b16 %v1206
          %v1230 = vunpack.c.l.b16 %v1207
          %v1231 = vunpack.c.l.b16 %v1208
          %v1232 = vunpack.c.l.b16 %v1209
          %v1233 = vunpack.c.l.b16 %v1210
          %v1234 = vunpack.c.l.b16 %v1211
          %v1235 = vunpack.c.l.b16 %v1212
          %v1236 = vpack.c.b16 %v1229, %v1228
          %v1237 = vpack.c.b16 %v1231, %v1230
          %v1238 = vpack.c.b16 %v1233, %v1232
          %v1239 = vpack.c.b16 %v1235, %v1234
          %vm1244 = vcmask 523264
          %v1246 = vsel %vm1244, %v1204, 0
          %1248 = vmatprep.subr.bf16.mxu0 0
          %1249 = vmatpush1.bf16.msra.mxu0 0
          %1250 = vmatprep.subr.bf16.mxu0 0
          %1251 = vmatpush1.bf16.msra.mxu0 0
          %1252 = vmatprep.subr.bf16.mxu0 0
          %1253 = vmatpush1.bf16.msra.mxu0 0
          %1254 = vmatprep.subr.bf16.mxu0 0
          %1255 = vmatpush1.bf16.msra.mxu0 0
          %1256 = vmatprep.subr.bf16.mxu0 0
          %1257 = vmatpush1.bf16.msra.mxu0 %v1239
          %1258 = vmatprep.subr.bf16.mxu0 0
          %1259 = vmatpush1.bf16.msra.mxu0 %v1238
          %1260 = vmatprep.subr.bf16.mxu0 0
          %1261 = vmatpush1.bf16.msra.mxu0 %v1237
          %1262 = vmatprep.subr.bf16.mxu0 0
          %1263 = vmatpush1.bf16.msra.mxu0 %v1236
          %1264 = vmatprep.subr.bf16.mxu0 0
          %1265 = vmatpush2.bf16.msra.mxu0 0
          %1266 = vmatprep.subr.bf16.mxu0 0
          %1267 = vmatpush2.bf16.msra.mxu0 0
          %1268 = vmatprep.subr.bf16.mxu0 0
          %1269 = vmatpush2.bf16.msra.mxu0 0
          %1270 = vmatprep.subr.bf16.mxu0 0
          %1271 = vmatpush2.bf16.msra.mxu0 0
          %1272 = vmatprep.subr.bf16.mxu0 0
          %1273 = vmatpush2.bf16.msra.mxu0 0
          %1274 = vmatprep.subr.bf16.mxu0 0
          %1275 = vmatpush2.bf16.msra.mxu0 0
          %1276 = vmatprep.subr.bf16.mxu0 0
          %1277 = vmatpush2.bf16.msra.mxu0 0
          %1278 = vmatprep.subr.bf16.mxu0 0
          %1279 = vmatpush2.bf16.msra.mxu0 0
          %1280 = vmatprep.mubr.bf16.mxu0 0
          %1281 = vmatmul.mubr.bf16.gmra.mxu0 %v1246
          %v1282 = vpop.f32.mrf.mxu0
          %v1283 = vadd.f32 %v1218, %v1282
          %v1284 = vpop.f32.mrf.mxu0
          %v1285 = vpop.f32.mrf.mxu0
          %v1286 = vadd.f32 %v1218, %v1285
          %v1287 = vpop.f32.mrf.mxu0
          %1288 = vdwg.mxu0
          %v1289 = vadd.f32 %v1283, %v1132
          %v1290 = vadd.f32 %v1286, %v1133
          %v1291 = vld [vmem:[%s12] sm:$0x1]
          %v1292 = vld [vmem:[%s13] sm:$0x1]
          %v1293 = vsel %vm641, %v1289, 0.0
          %1294 = vadd.xlane.f32.xlu0 %v1293
          %v1295 = vpop.xlane.xlu0 %1294
          %v1296 = vsel %vm641, %v1290, 0.0
          %1297 = vadd.xlane.f32.xlu0 %v1296
          %v1298 = vpop.xlane.xlu0 %1297
          %v1299 = vmul.f32 %v1295, %v1097
          %v1300 = vmul.f32 %v1298, %v1097
          %v1301 = vsub.f32 %v1289, %v1299
          %v1302 = vsub.f32 %v1290, %v1300
          %v1303 = vmul.f32 %v1301, %v1301
          %v1304 = vmul.f32 %v1302, %v1302
          %v1305 = vsel %vm641, %v1303, 0.0
          %1306 = vadd.xlane.f32.xlu0 %v1305
          %v1307 = vpop.xlane.xlu0 %1306
          %v1308 = vsel %vm641, %v1304, 0.0
          %1309 = vadd.xlane.f32.xlu0 %v1308
          %v1310 = vpop.xlane.xlu0 %1309
          %v1311 = vmul.f32 %v1307, %v1097
          %v1312 = vmul.f32 %v1310, %v1097
          %v1313 = vadd.f32 %v1311, 1e-05
          %v1314 = vadd.f32 %v1312, 1e-05
          %v1315 = vrsqrt.pop %v1313
          %v1316 = vrsqrt.pop %v1314
          %v1317 = vmul.f32 %v1301, %v1315
          %v1318 = vmul.f32 %v1302, %v1316
          %v1320 = vlaneseq
          %v1321 = vshrl.u32 %v1320, 7
          %v1322 = vsub.s32 0, %v1321
          %v1323 = vrot.slane %v1291, %v1322
          %v1325 = vmul.f32 %v1317, %v1323
          %v1326 = vmul.f32 %v1318, %v1323
          %v1328 = vlaneseq
          %v1329 = vshrl.u32 %v1328, 7
          %v1330 = vsub.s32 0, %v1329
          %v1331 = vrot.slane %v1292, %v1330
          %v1333 = vadd.f32 %v1325, %v1331
          %v1334 = vadd.f32 %v1326, %v1331
          %1335 = vst.msk [vmem:[#allocation3] sm:$0xff] %vm641, %v1333
          %1336 = vst.msk [vmem:[#allocation3 + $0x8] sm:$0xff] %vm641, %v1334
        $region84: #{tpu_custom_call.1} parent=75 // pred_fallthru
          _
        %s1337 = sand.u32 %s403, 1
        %s1338 = scalar_lea.sflag [#allocation6], %s1337
        %s1339 = sand.u32 %s403, 1
        %s1340 = smul.addr %s1339, 16
        %s1341 = scalar_lea.vmem [#allocation5], %s1340
        // Predicated region
        $region85: #{tpu_custom_call.1} parent=75 // pred_check
          %p1342 = pneg %p385
        $region86: #{tpu_custom_call.1} parent=75 // pred_check_branch
          %1344 = sbr.rel (%p1342) target = $region88
        $region87: #{tpu_custom_call.1} parent=75 // pred_region
          %s1345 = smul.u32 2, %s35
          %s1347 = ssub.s32 256, 256
          %1348 = vsyncadd [#allocation4], %s1347
          %s1349 = smul.addr %s1345, 128
          %s1350 = scalar_lea.hbm %s14, %s1349
          %s1351 = sshll.u32 [#allocation3], 4
          %s1352 = int_to_ptr.vmem [resolvable:$true] %s1351
          %1357 = dma.vmem_to_hbm [thread:$0]  %s1352, 256, %s1350, [#allocation4], 128, 128, 8
        $region88: #{tpu_custom_call.1} parent=75 // pred_fallthru
          _
        // Predicated region
        $region89: #{tpu_custom_call.1} parent=75 // pred_check
          %p1358 = pneg %p413
        $region90: #{tpu_custom_call.1} parent=75 // pred_check_branch
          %1360 = sbr.rel (%p1358) target = $region92
        $region91: #{tpu_custom_call.1} parent=75 // pred_region
          %s1361 = smul.u32 2, %s35
          %s1363 = ssub.s32 256, 256
          %1364 = vsyncadd %s1338, %s1363
          %s1365 = smul.addr %s1361, 4
          %s1366 = sadd.s32 %s36, %s1365
          %s1367 = smul.addr %s1366, 128
          %s1368 = scalar_lea.hbm %s15, %s1367
          %s1369 = sshll.u32 %s1341, 4
          %s1370 = int_to_ptr.vmem [resolvable:$true] %s1369
          %1375 = dma.vmem_to_hbm [thread:$0]  %s1370, 256, %s1368, %s1338, 128, 512, 8
        $region92: #{tpu_custom_call.1} parent=75 // pred_fallthru
          _
        // Predicated region
        $region93: #{tpu_custom_call.1} parent=75 // pred_check
          %p1376 = pneg %p385
        $region94: #{tpu_custom_call.1} parent=75 // pred_check_branch
          %1378 = sbr.rel (%p1376) target = $region96
        $region95: #{tpu_custom_call.1} parent=75 // pred_region
          %1379 = dma.done [#allocation4], 256
        $region96: #{tpu_custom_call.1} parent=75 // pred_fallthru
          _
      $region76: #{tpu_custom_call.1} parent=5 // pred_fallthru
        _
      %p1380 = scmp.le.s32.totalorder 2, %s26
      // Predicated region
      $region97: #{tpu_custom_call.1} parent=5 // pred_check
        %p1381 = pneg %p1380
      $region98: #{tpu_custom_call.1} parent=5 // pred_check_branch
        %1383 = sbr.rel (%p1381) target = $region100
      $region99: #{tpu_custom_call.1} parent=5 // pred_region
        %s1384 = ssub.s32 %s26, 2
        // Predicated region
        $region101: #{tpu_custom_call.1} parent=99 // pred_check
          %p1385 = pneg %p419
        $region102: #{tpu_custom_call.1} parent=99 // pred_check_branch
          %1387 = sbr.rel (%p1385) target = $region104
        $region103: #{tpu_custom_call.1} parent=99 // pred_region
          %s1388 = sand.u32 %s404, 1
          %s1389 = scalar_lea.sflag [#allocation6], %s1388
          %s1390 = sand.u32 %s404, 1
          %s1391 = smul.addr %s1390, 16
          %s1392 = scalar_lea.vmem [#allocation5], %s1391
          %1393 = dma.done %s1389, 256
        $region104: #{tpu_custom_call.1} parent=99 // pred_fallthru
          _
      $region100: #{tpu_custom_call.1} parent=5 // pred_fallthru
        _
    $region6: #{tpu_custom_call.1} parent=1 // loop_footer
      %s30 = sadd.s32 1, %s26
    $region7: #{tpu_custom_call.1} parent=1 // loop_footer_branch
      %25 = sbr.rel target = $region3
    $region8: #{tpu_custom_call.1} parent=1 // loop_exit
      _
    %1394 = vsyncpa [#allocation4], 1
    %s1395 = scalar_lea.sflag [#allocation4], 1
    %1396 = vsyncpa %s1395, 1
    %1397 = vsyncpa [#allocation6], 1
    %s1398 = scalar_lea.sflag [#allocation6], 1
    %1399 = vsyncpa %s1398, 1

</llo_original>
